<compile_context>
chip_gen: v5e
topology: v5e:2x2
jax: 0.10.0
libtpu: 0.0.40
codegen_flags: <defaults>
</compile_context>

<pallas_src>
import math
import functools

import jax
import jax.numpy as jnp
from jax import lax
from jax.experimental import pallas as pl
from jax.experimental.pallas import tpu as pltpu

EPS = 1e-5


def _layer_norm(x, g, b):
    mu = jnp.mean(x, axis=-1, keepdims=True)
    xc = x - mu
    var = jnp.mean(xc * xc, axis=-1, keepdims=True)
    inv = lax.rsqrt(var + EPS)
    return xc * inv * g + b


def _gelu_exact(x):
    # nn.GELU default is the exact erf formulation.
    return 0.5 * x * (1.0 + lax.erf(x * (1.0 / math.sqrt(2.0))))


def attention_block_kernel(
    x_ref,                        # (1, S, E)
    ln1_g_ref, ln1_b_ref,         # (1, E)
    wq_ref, wk_ref, wv_ref,       # (H, E, Dh)  head-major; 1/sqrt(Dh) folded into wq
    bq_ref, bk_ref, bv_ref,       # (H, 1, Dh)  (bq also pre-scaled)
    wo_ref, bo_ref,               # (H, Dh, E), (1, E)
    ln2_g_ref, ln2_b_ref,         # (1, E)
    w_fc1_ref, b_fc1_ref,         # (E, 4E), (1, 4E)
    w_fc2_ref, b_fc2_ref,         # (4E, E), (1, E)
    o_ref,                        # (1, S, E)
    *, num_heads: int, matmul_dtype,
):
    x = x_ref[0]                                   # (S, E) f32
    S, E = x.shape
    H = num_heads
    cdt = matmul_dtype

    # ---- norm1 (f32) ------------------------------------------------------
    xn = _layer_norm(x, ln1_g_ref[...], ln1_b_ref[...])            # (S, E)

    # ---- head-batched Q/K/V projections (single batched dot_general each) -
    xb = jnp.broadcast_to(xn.astype(cdt)[None, :, :], (H, S, E))   # (H, S, E)
    q = jnp.einsum('hse,hed->hsd', xb, wq_ref[...],
                   preferred_element_type=jnp.float32) + bq_ref[...]   # (H, S, Dh)
    k = jnp.einsum('hse,hed->hsd', xb, wk_ref[...],
                   preferred_element_type=jnp.float32) + bk_ref[...]
    v = jnp.einsum('hse,hed->hsd', xb, wv_ref[...],
                   preferred_element_type=jnp.float32) + bv_ref[...]

    # ---- softmax(q k^T) v, batched over heads (f32 score math) ------------
    s = jnp.einsum('hqd,hkd->hqk', q, k,
                   preferred_element_type=jnp.float32)             # (H, S, S)
    s = s - jnp.max(s, axis=-1, keepdims=True)
    p = jnp.exp(s)
    p = p * pl.reciprocal(jnp.sum(p, axis=-1, keepdims=True), approx=True)
    head_out = jnp.einsum('hqk,hkd->hqd', p, v,
                          preferred_element_type=jnp.float32)      # (H, S, Dh)

    # ---- output projection: batched per-head matmul, then sum over heads --
    attn = jnp.einsum('hsd,hde->hse', head_out.astype(cdt), wo_ref[...],
                      preferred_element_type=jnp.float32)          # (H, S, E)
    attn = jnp.sum(attn, axis=0) + bo_ref[...]                     # (S, E)
    x1 = x + attn                                                  # residual 1

    # ---- norm2 + MLP -------------------------------------------------------
    xn2 = _layer_norm(x1, ln2_g_ref[...], ln2_b_ref[...])
    hid = jnp.dot(xn2.astype(cdt), w_fc1_ref[...],
                  preferred_element_type=jnp.float32) + b_fc1_ref[...]
    hid = _gelu_exact(hid)                                         # f32 GELU
    mlp = jnp.dot(hid.astype(cdt), w_fc2_ref[...],
                  preferred_element_type=jnp.float32) + b_fc2_ref[...]

    o_ref[0] = (x1 + mlp).astype(o_ref.dtype)                      # residual 2


def attention_block(x, params, num_heads, matmul_dtype=jnp.float32):
    B, S, E = x.shape
    assert E % num_heads == 0, "embed_dim must be divisible by num_heads"
    H = num_heads
    Dh = E // H
    H4 = 4 * E
    scale = 1.0 / math.sqrt(Dh)

    # --- one-time weight preprocessing (outside the kernel) -----------------
    w_qkv, b_qkv = params["w_qkv"], params["b_qkv"]
    w_q, w_k, w_v = (w_qkv[:, i * E:(i + 1) * E] for i in range(3))
    b_q, b_k, b_v = (b_qkv[:, i * E:(i + 1) * E] for i in range(3))

    def w_head_major(w):   # (E, E) -> (H, E, Dh)
        return jnp.transpose(w.reshape(E, H, Dh), (1, 0, 2))

    def b_head_major(b):   # (1, E) -> (H, 1, Dh)
        return jnp.transpose(b.reshape(1, H, Dh), (1, 0, 2))

    wq = (w_head_major(w_q) * scale).astype(matmul_dtype)  # fold 1/sqrt(Dh) into Q
    wk = w_head_major(w_k).astype(matmul_dtype)
    wv = w_head_major(w_v).astype(matmul_dtype)
    bq = b_head_major(b_q) * scale                          # biases stay f32
    bk = b_head_major(b_k)
    bv = b_head_major(b_v)
    wo = params["w_o"].reshape(H, Dh, E).astype(matmul_dtype)
    w_fc1 = params["w_fc1"].astype(matmul_dtype)
    w_fc2 = params["w_fc2"].astype(matmul_dtype)

    def full_spec(shape):
        nd = len(shape)
        return pl.BlockSpec(shape, lambda b, _nd=nd: (0,) * _nd)

    in_specs = [
        pl.BlockSpec((1, S, E), lambda b: (b, 0, 0)),              # x
        full_spec((1, E)), full_spec((1, E)),                      # ln1 gamma/beta
        full_spec((H, E, Dh)), full_spec((H, E, Dh)), full_spec((H, E, Dh)),  # wq/wk/wv
        full_spec((H, 1, Dh)), full_spec((H, 1, Dh)), full_spec((H, 1, Dh)),  # bq/bk/bv
        full_spec((H, Dh, E)), full_spec((1, E)),                  # out proj
        full_spec((1, E)), full_spec((1, E)),                      # ln2 gamma/beta
        full_spec((E, H4)), full_spec((1, H4)),                    # fc1
        full_spec((H4, E)), full_spec((1, E)),                     # fc2
    ]

    kernel = functools.partial(attention_block_kernel,
                               num_heads=num_heads, matmul_dtype=matmul_dtype)
    return pl.pallas_call(
        kernel,
        out_shape=jax.ShapeDtypeStruct((B, S, E), jnp.float32),
        grid_spec=pltpu.PrefetchScalarGridSpec(
            num_scalar_prefetch=0,
            grid=(B,),
            in_specs=in_specs,
            out_specs=pl.BlockSpec((1, S, E), lambda b: (b, 0, 0)),
        ),
        compiler_params=pltpu.CompilerParams(
            dimension_semantics=("parallel",),     # batch steps shard across TCs
            vmem_limit_bytes=32 * 1024 * 1024,
        ),
    )(
        x,
        params["ln1_g"], params["ln1_b"],
        wq, wk, wv, bq, bk, bv,
        wo, params["b_o"],
        params["ln2_g"], params["ln2_b"],
        w_fc1, params["b_fc1"],
        w_fc2, params["b_fc2"],
    )


def ref_forward(x, p, num_heads):
    """Pure-JAX reference mirroring the PyTorch module (eval mode)."""
    B, S, E = x.shape
    Dh = E // num_heads

    def ln(t, g, b):
        mu = t.mean(-1, keepdims=True)
        var = ((t - mu) ** 2).mean(-1, keepdims=True)
        return (t - mu) / jnp.sqrt(var + EPS) * g + b

    xn = ln(x, p["ln1_g"], p["ln1_b"])
    qkv = xn @ p["w_qkv"] + p["b_qkv"]
    q, k, v = jnp.split(qkv, 3, axis=-1)

    def heads(t):
        return t.reshape(B, S, num_heads, Dh).transpose(0, 2, 1, 3)

    qh, kh, vh = heads(q), heads(k), heads(v)
    s = (qh @ kh.transpose(0, 1, 3, 2)) / math.sqrt(Dh)
    pattn = jax.nn.softmax(s, axis=-1)
    o = (pattn @ vh).transpose(0, 2, 1, 3).reshape(B, S, E)
    attn = o @ p["w_o"] + p["b_o"]
    x1 = x + attn

    xn2 = ln(x1, p["ln2_g"], p["ln2_b"])
    h = xn2 @ p["w_fc1"] + p["b_fc1"]
    h = 0.5 * h * (1.0 + lax.erf(h / math.sqrt(2.0)))
    return x1 + h @ p["w_fc2"] + p["b_fc2"]


def make_params(key, embed_dim):
    E = embed_dim
    ks = jax.random.split(key, 8)
    scale = 0.05
    # PyTorch Linear stores (out, in); we pre-transpose so kernel does x @ W + b.
    return {
        "ln1_g": jnp.ones((1, E), jnp.float32),
        "ln1_b": jnp.zeros((1, E), jnp.float32),
        "w_qkv": scale * jax.random.normal(ks[0], (E, 3 * E), jnp.float32),
        "b_qkv": scale * jax.random.normal(ks[1], (1, 3 * E), jnp.float32),
        "w_o":   scale * jax.random.normal(ks[2], (E, E), jnp.float32),
        "b_o":   scale * jax.random.normal(ks[3], (1, E), jnp.float32),
        "ln2_g": jnp.ones((1, E), jnp.float32),
        "ln2_b": jnp.zeros((1, E), jnp.float32),
        "w_fc1": scale * jax.random.normal(ks[4], (E, 4 * E), jnp.float32),
        "b_fc1": scale * jax.random.normal(ks[5], (1, 4 * E), jnp.float32),
        "w_fc2": scale * jax.random.normal(ks[6], (4 * E, E), jnp.float32),
        "b_fc2": scale * jax.random.normal(ks[7], (1, E), jnp.float32),
    }


if __name__ == "__main__":
    B, S, E, H = 2, 8, 32, 8          # batch=2, seq=8, embed_dim=32, num_heads=8
    key = jax.random.PRNGKey(0)
    kx, kp = jax.random.split(key)
    x = jax.random.normal(kx, (B, S, E), jnp.float32)
    params = make_params(kp, E)

    ref = ref_forward(x, params, num_heads=H)

    # f32 matmul path (v5e-friendly; exact parity with the PyTorch module).
    out = jax.block_until_ready(attention_block(x, params, num_heads=H))
    assert out.shape == (B, S, E)
    err = float(jnp.max(jnp.abs(out - ref)))
    assert jnp.allclose(out, ref, atol=3e-3, rtol=3e-3), err

    # bf16 matmul-operand path (v6e/v7x), f32 accumulation — looser tolerance.
    out_bf16 = jax.block_until_ready(
        attention_block(x, params, num_heads=H, matmul_dtype=jnp.bfloat16))
    err_bf = float(jnp.max(jnp.abs(out_bf16 - ref)))
    assert jnp.allclose(out_bf16, ref, atol=5e-2, rtol=5e-2), err_bf

    print("KERNEL_OK")
</pallas_src>

<mosaic_0001>
module attributes {stable_mosaic.version = 11 : i64} {
  func.func @attention_block_kernel(%arg0: i32, %arg1: memref<1x8x32xf32, #tpu.memory_space<vmem>>, %arg2: memref<1x32xf32, #tpu.memory_space<vmem>>, %arg3: memref<1x32xf32, #tpu.memory_space<vmem>>, %arg4: memref<8x32x4xf32, #tpu.memory_space<vmem>>, %arg5: memref<8x32x4xf32, #tpu.memory_space<vmem>>, %arg6: memref<8x32x4xf32, #tpu.memory_space<vmem>>, %arg7: memref<8x1x4xf32, #tpu.memory_space<vmem>>, %arg8: memref<8x1x4xf32, #tpu.memory_space<vmem>>, %arg9: memref<8x1x4xf32, #tpu.memory_space<vmem>>, %arg10: memref<8x4x32xf32, #tpu.memory_space<vmem>>, %arg11: memref<1x32xf32, #tpu.memory_space<vmem>>, %arg12: memref<1x32xf32, #tpu.memory_space<vmem>>, %arg13: memref<1x32xf32, #tpu.memory_space<vmem>>, %arg14: memref<32x128xf32, #tpu.memory_space<vmem>>, %arg15: memref<1x128xf32, #tpu.memory_space<vmem>>, %arg16: memref<128x32xf32, #tpu.memory_space<vmem>>, %arg17: memref<1x32xf32, #tpu.memory_space<vmem>>, %arg18: memref<1x8x32xf32, #tpu.memory_space<vmem>>) attributes {dimension_semantics = [#tpu.dimension_semantics<parallel>], iteration_bounds = array<i64: 2>, scalar_prefetch = 0 : i64, scratch_operands = 0 : i64, tpu.core_type = #tpu.core_type<tc>, window_params = [{transform_indices = @transform_0, window_bounds = array<i64: 1, 8, 32>}, {pipeline_mode = #tpu.pipeline_mode<synchronous>, transform_indices = @transform_1, window_bounds = array<i64: 1, 32>}, {pipeline_mode = #tpu.pipeline_mode<synchronous>, transform_indices = @transform_2, window_bounds = array<i64: 1, 32>}, {pipeline_mode = #tpu.pipeline_mode<synchronous>, transform_indices = @transform_3, window_bounds = array<i64: 8, 32, 4>}, {pipeline_mode = #tpu.pipeline_mode<synchronous>, transform_indices = @transform_4, window_bounds = array<i64: 8, 32, 4>}, {pipeline_mode = #tpu.pipeline_mode<synchronous>, transform_indices = @transform_5, window_bounds = array<i64: 8, 32, 4>}, {pipeline_mode = #tpu.pipeline_mode<synchronous>, transform_indices = @transform_6, window_bounds = array<i64: 8, 1, 4>}, {pipeline_mode = #tpu.pipeline_mode<synchronous>, transform_indices = @transform_7, window_bounds = array<i64: 8, 1, 4>}, {pipeline_mode = #tpu.pipeline_mode<synchronous>, transform_indices = @transform_8, window_bounds = array<i64: 8, 1, 4>}, {pipeline_mode = #tpu.pipeline_mode<synchronous>, transform_indices = @transform_9, window_bounds = array<i64: 8, 4, 32>}, {pipeline_mode = #tpu.pipeline_mode<synchronous>, transform_indices = @transform_10, window_bounds = array<i64: 1, 32>}, {pipeline_mode = #tpu.pipeline_mode<synchronous>, transform_indices = @transform_11, window_bounds = array<i64: 1, 32>}, {pipeline_mode = #tpu.pipeline_mode<synchronous>, transform_indices = @transform_12, window_bounds = array<i64: 1, 32>}, {pipeline_mode = #tpu.pipeline_mode<synchronous>, transform_indices = @transform_13, window_bounds = array<i64: 32, 128>}, {pipeline_mode = #tpu.pipeline_mode<synchronous>, transform_indices = @transform_14, window_bounds = array<i64: 1, 128>}, {pipeline_mode = #tpu.pipeline_mode<synchronous>, transform_indices = @transform_15, window_bounds = array<i64: 128, 32>}, {pipeline_mode = #tpu.pipeline_mode<synchronous>, transform_indices = @transform_16, window_bounds = array<i64: 1, 32>}, {transform_indices = @transform_17, window_bounds = array<i64: 1, 8, 32>}]} {
    %c0 = arith.constant 0 : index
    %c0_0 = arith.constant 0 : index
    %c0_1 = arith.constant 0 : index
    %0 = vector.load %arg1[%c0, %c0_0, %c0_1] : memref<1x8x32xf32, #tpu.memory_space<vmem>>, vector<1x8x32xf32>
    %1 = vector.shape_cast %0 : vector<1x8x32xf32> to vector<8x32xf32>
    %c0_2 = arith.constant 0 : index
    %c0_3 = arith.constant 0 : index
    %2 = vector.load %arg2[%c0_2, %c0_3] : memref<1x32xf32, #tpu.memory_space<vmem>>, vector<1x32xf32>
    %c0_4 = arith.constant 0 : index
    %c0_5 = arith.constant 0 : index
    %3 = vector.load %arg3[%c0_4, %c0_5] : memref<1x32xf32, #tpu.memory_space<vmem>>, vector<1x32xf32>
    %cst = arith.constant dense<0.000000e+00> : vector<8xf32>
    %4 = vector.multi_reduction <add>, %1, %cst [1] : vector<8x32xf32> to vector<8xf32>
    %5 = vector.shape_cast %4 : vector<8xf32> to vector<8x1xf32>
    %cst_6 = arith.constant 3.200000e+01 : f32
    %6 = vector.broadcast %cst_6 : f32 to vector<8x1xf32>
    %7 = arith.divf %5, %6 : vector<8x1xf32>
    %8 = vector.broadcast %7 : vector<8x1xf32> to vector<8x32xf32>
    %9 = arith.subf %1, %8 : vector<8x32xf32>
    %10 = arith.mulf %9, %9 : vector<8x32xf32>
    %cst_7 = arith.constant dense<0.000000e+00> : vector<8xf32>
    %11 = vector.multi_reduction <add>, %10, %cst_7 [1] : vector<8x32xf32> to vector<8xf32>
    %12 = vector.shape_cast %11 : vector<8xf32> to vector<8x1xf32>
    %cst_8 = arith.constant 3.200000e+01 : f32
    %13 = vector.broadcast %cst_8 : f32 to vector<8x1xf32>
    %14 = arith.divf %12, %13 : vector<8x1xf32>
    %cst_9 = arith.constant 9.99999974E-6 : f32
    %15 = vector.broadcast %cst_9 : f32 to vector<8x1xf32>
    %16 = arith.addf %14, %15 : vector<8x1xf32>
    %17 = math.rsqrt %16 : vector<8x1xf32>
    %18 = vector.broadcast %17 : vector<8x1xf32> to vector<8x32xf32>
    %19 = arith.mulf %9, %18 : vector<8x32xf32>
    %20 = vector.broadcast %2 : vector<1x32xf32> to vector<8x32xf32>
    %21 = arith.mulf %19, %20 : vector<8x32xf32>
    %22 = vector.broadcast %3 : vector<1x32xf32> to vector<8x32xf32>
    %23 = arith.addf %21, %22 : vector<8x32xf32>
    %24 = vector.shape_cast %23 : vector<8x32xf32> to vector<1x8x32xf32>
    %25 = vector.shape_cast %24 : vector<1x8x32xf32> to vector<1x8x32xf32>
    %26 = vector.broadcast %25 : vector<1x8x32xf32> to vector<8x8x32xf32>
    %c0_10 = arith.constant 0 : index
    %c0_11 = arith.constant 0 : index
    %c0_12 = arith.constant 0 : index
    %27 = vector.load %arg4[%c0_10, %c0_11, %c0_12] : memref<8x32x4xf32, #tpu.memory_space<vmem>>, vector<8x32x4xf32>
    "tpu.trace_start"() <{level = 10 : i32, message = "hse,hed->hsd"}> : () -> ()
    %cst_13 = arith.constant dense<0.000000e+00> : vector<8x8x4xf32>
    %28 = tpu.matmul %26, %27, %cst_13 {dimension_numbers = #tpu.dot_dimension_numbers<[2], [1], [1], [2], [0, 0, 0, 1, 1, 2], [0], [0]>} : vector<8x8x32xf32>, vector<8x32x4xf32>, vector<8x8x4xf32> -> vector<8x8x4xf32>
    "tpu.trace_stop"() : () -> ()
    %c0_14 = arith.constant 0 : index
    %c0_15 = arith.constant 0 : index
    %c0_16 = arith.constant 0 : index
    %29 = vector.load %arg7[%c0_14, %c0_15, %c0_16] : memref<8x1x4xf32, #tpu.memory_space<vmem>>, vector<8x1x4xf32>
    %30 = vector.broadcast %29 : vector<8x1x4xf32> to vector<8x8x4xf32>
    %31 = arith.addf %28, %30 : vector<8x8x4xf32>
    %c0_17 = arith.constant 0 : index
    %c0_18 = arith.constant 0 : index
    %c0_19 = arith.constant 0 : index
    %32 = vector.load %arg5[%c0_17, %c0_18, %c0_19] : memref<8x32x4xf32, #tpu.memory_space<vmem>>, vector<8x32x4xf32>
    "tpu.trace_start"() <{level = 10 : i32, message = "hse,hed->hsd"}> : () -> ()
    %cst_20 = arith.constant dense<0.000000e+00> : vector<8x8x4xf32>
    %33 = tpu.matmul %26, %32, %cst_20 {dimension_numbers = #tpu.dot_dimension_numbers<[2], [1], [1], [2], [0, 0, 0, 1, 1, 2], [0], [0]>} : vector<8x8x32xf32>, vector<8x32x4xf32>, vector<8x8x4xf32> -> vector<8x8x4xf32>
    "tpu.trace_stop"() : () -> ()
    %c0_21 = arith.constant 0 : index
    %c0_22 = arith.constant 0 : index
    %c0_23 = arith.constant 0 : index
    %34 = vector.load %arg8[%c0_21, %c0_22, %c0_23] : memref<8x1x4xf32, #tpu.memory_space<vmem>>, vector<8x1x4xf32>
    %35 = vector.broadcast %34 : vector<8x1x4xf32> to vector<8x8x4xf32>
    %36 = arith.addf %33, %35 : vector<8x8x4xf32>
    %c0_24 = arith.constant 0 : index
    %c0_25 = arith.constant 0 : index
    %c0_26 = arith.constant 0 : index
    %37 = vector.load %arg6[%c0_24, %c0_25, %c0_26] : memref<8x32x4xf32, #tpu.memory_space<vmem>>, vector<8x32x4xf32>
    "tpu.trace_start"() <{level = 10 : i32, message = "hse,hed->hsd"}> : () -> ()
    %cst_27 = arith.constant dense<0.000000e+00> : vector<8x8x4xf32>
    %38 = tpu.matmul %26, %37, %cst_27 {dimension_numbers = #tpu.dot_dimension_numbers<[2], [1], [1], [2], [0, 0, 0, 1, 1, 2], [0], [0]>} : vector<8x8x32xf32>, vector<8x32x4xf32>, vector<8x8x4xf32> -> vector<8x8x4xf32>
    "tpu.trace_stop"() : () -> ()
    %c0_28 = arith.constant 0 : index
    %c0_29 = arith.constant 0 : index
    %c0_30 = arith.constant 0 : index
    %39 = vector.load %arg9[%c0_28, %c0_29, %c0_30] : memref<8x1x4xf32, #tpu.memory_space<vmem>>, vector<8x1x4xf32>
    %40 = vector.broadcast %39 : vector<8x1x4xf32> to vector<8x8x4xf32>
    %41 = arith.addf %38, %40 : vector<8x8x4xf32>
    "tpu.trace_start"() <{level = 10 : i32, message = "hqd,hkd->hqk"}> : () -> ()
    %cst_31 = arith.constant dense<0.000000e+00> : vector<8x8x8xf32>
    %42 = tpu.matmul %31, %36, %cst_31 {dimension_numbers = #tpu.dot_dimension_numbers<[2], [2], [1], [1], [0, 0, 0, 1, 1, 1], [0], [0]>} : vector<8x8x4xf32>, vector<8x8x4xf32>, vector<8x8x8xf32> -> vector<8x8x8xf32>
    "tpu.trace_stop"() : () -> ()
    %cst_32 = arith.constant dense<0xFF800000> : vector<8x8xf32>
    %43 = vector.multi_reduction <maximumf>, %42, %cst_32 [2] : vector<8x8x8xf32> to vector<8x8xf32>
    %44 = vector.shape_cast %43 : vector<8x8xf32> to vector<8x8x1xf32>
    %45 = vector.broadcast %44 : vector<8x8x1xf32> to vector<8x8x8xf32>
    %46 = arith.subf %42, %45 : vector<8x8x8xf32>
    %47 = math.exp %46 : vector<8x8x8xf32>
    %cst_33 = arith.constant dense<0.000000e+00> : vector<8x8xf32>
    %48 = vector.multi_reduction <add>, %47, %cst_33 [2] : vector<8x8x8xf32> to vector<8x8xf32>
    %49 = vector.shape_cast %48 : vector<8x8xf32> to vector<8x8x1xf32>
    %50 = tpu.reciprocal %49 {approx = true} : vector<8x8x1xf32> -> vector<8x8x1xf32>
    %51 = vector.broadcast %50 : vector<8x8x1xf32> to vector<8x8x8xf32>
    %52 = arith.mulf %47, %51 : vector<8x8x8xf32>
    "tpu.trace_start"() <{level = 10 : i32, message = "hqk,hkd->hqd"}> : () -> ()
    %cst_34 = arith.constant dense<0.000000e+00> : vector<8x8x4xf32>
    %53 = tpu.matmul %52, %41, %cst_34 {dimension_numbers = #tpu.dot_dimension_numbers<[2], [1], [1], [2], [0, 0, 0, 1, 1, 2], [0], [0]>} : vector<8x8x8xf32>, vector<8x8x4xf32>, vector<8x8x4xf32> -> vector<8x8x4xf32>
    "tpu.trace_stop"() : () -> ()
    %c0_35 = arith.constant 0 : index
    %c0_36 = arith.constant 0 : index
    %c0_37 = arith.constant 0 : index
    %54 = vector.load %arg10[%c0_35, %c0_36, %c0_37] : memref<8x4x32xf32, #tpu.memory_space<vmem>>, vector<8x4x32xf32>
    "tpu.trace_start"() <{level = 10 : i32, message = "hsd,hde->hse"}> : () -> ()
    %cst_38 = arith.constant dense<0.000000e+00> : vector<8x8x32xf32>
    %55 = tpu.matmul %53, %54, %cst_38 {dimension_numbers = #tpu.dot_dimension_numbers<[2], [1], [1], [2], [0, 0, 0, 1, 1, 2], [0], [0]>} : vector<8x8x4xf32>, vector<8x4x32xf32>, vector<8x8x32xf32> -> vector<8x8x32xf32>
    "tpu.trace_stop"() : () -> ()
    %cst_39 = arith.constant dense<0.000000e+00> : vector<8x32xf32>
    %56 = vector.multi_reduction <add>, %55, %cst_39 [0] : vector<8x8x32xf32> to vector<8x32xf32>
    %c0_40 = arith.constant 0 : index
    %c0_41 = arith.constant 0 : index
    %57 = vector.load %arg11[%c0_40, %c0_41] : memref<1x32xf32, #tpu.memory_space<vmem>>, vector<1x32xf32>
    %58 = vector.broadcast %57 : vector<1x32xf32> to vector<8x32xf32>
    %59 = arith.addf %56, %58 : vector<8x32xf32>
    %60 = arith.addf %1, %59 : vector<8x32xf32>
    %c0_42 = arith.constant 0 : index
    %c0_43 = arith.constant 0 : index
    %61 = vector.load %arg12[%c0_42, %c0_43] : memref<1x32xf32, #tpu.memory_space<vmem>>, vector<1x32xf32>
    %c0_44 = arith.constant 0 : index
    %c0_45 = arith.constant 0 : index
    %62 = vector.load %arg13[%c0_44, %c0_45] : memref<1x32xf32, #tpu.memory_space<vmem>>, vector<1x32xf32>
    %cst_46 = arith.constant dense<0.000000e+00> : vector<8xf32>
    %63 = vector.multi_reduction <add>, %60, %cst_46 [1] : vector<8x32xf32> to vector<8xf32>
    %64 = vector.shape_cast %63 : vector<8xf32> to vector<8x1xf32>
    %cst_47 = arith.constant 3.200000e+01 : f32
    %65 = vector.broadcast %cst_47 : f32 to vector<8x1xf32>
    %66 = arith.divf %64, %65 : vector<8x1xf32>
    %67 = vector.broadcast %66 : vector<8x1xf32> to vector<8x32xf32>
    %68 = arith.subf %60, %67 : vector<8x32xf32>
    %69 = arith.mulf %68, %68 : vector<8x32xf32>
    %cst_48 = arith.constant dense<0.000000e+00> : vector<8xf32>
    %70 = vector.multi_reduction <add>, %69, %cst_48 [1] : vector<8x32xf32> to vector<8xf32>
    %71 = vector.shape_cast %70 : vector<8xf32> to vector<8x1xf32>
    %cst_49 = arith.constant 3.200000e+01 : f32
    %72 = vector.broadcast %cst_49 : f32 to vector<8x1xf32>
    %73 = arith.divf %71, %72 : vector<8x1xf32>
    %cst_50 = arith.constant 9.99999974E-6 : f32
    %74 = vector.broadcast %cst_50 : f32 to vector<8x1xf32>
    %75 = arith.addf %73, %74 : vector<8x1xf32>
    %76 = math.rsqrt %75 : vector<8x1xf32>
    %77 = vector.broadcast %76 : vector<8x1xf32> to vector<8x32xf32>
    %78 = arith.mulf %68, %77 : vector<8x32xf32>
    %79 = vector.broadcast %61 : vector<1x32xf32> to vector<8x32xf32>
    %80 = arith.mulf %78, %79 : vector<8x32xf32>
    %81 = vector.broadcast %62 : vector<1x32xf32> to vector<8x32xf32>
    %82 = arith.addf %80, %81 : vector<8x32xf32>
    %c0_51 = arith.constant 0 : index
    %c0_52 = arith.constant 0 : index
    %83 = vector.load %arg14[%c0_51, %c0_52] : memref<32x128xf32, #tpu.memory_space<vmem>>, vector<32x128xf32>
    %cst_53 = arith.constant dense<0.000000e+00> : vector<8x128xf32>
    %84 = tpu.matmul %82, %83, %cst_53 {dimension_numbers = #tpu.dot_dimension_numbers<[1], [0], [0], [1], [0, 0, 1, 1], [], []>} : vector<8x32xf32>, vector<32x128xf32>, vector<8x128xf32> -> vector<8x128xf32>
    %c0_54 = arith.constant 0 : index
    %c0_55 = arith.constant 0 : index
    %85 = vector.load %arg15[%c0_54, %c0_55] : memref<1x128xf32, #tpu.memory_space<vmem>>, vector<1x128xf32>
    %86 = vector.broadcast %85 : vector<1x128xf32> to vector<8x128xf32>
    %87 = arith.addf %84, %86 : vector<8x128xf32>
    %cst_56 = arith.constant 5.000000e-01 : f32
    %88 = vector.broadcast %cst_56 : f32 to vector<8x128xf32>
    %89 = arith.mulf %88, %87 : vector<8x128xf32>
    %cst_57 = arith.constant 0.707106769 : f32
    %90 = vector.broadcast %cst_57 : f32 to vector<8x128xf32>
    %91 = arith.mulf %87, %90 : vector<8x128xf32>
    %92 = math.erf %91 : vector<8x128xf32>
    %cst_58 = arith.constant 1.000000e+00 : f32
    %93 = vector.broadcast %cst_58 : f32 to vector<8x128xf32>
    %94 = arith.addf %93, %92 : vector<8x128xf32>
    %95 = arith.mulf %89, %94 : vector<8x128xf32>
    %c0_59 = arith.constant 0 : index
    %c0_60 = arith.constant 0 : index
    %96 = vector.load %arg16[%c0_59, %c0_60] : memref<128x32xf32, #tpu.memory_space<vmem>>, vector<128x32xf32>
    %cst_61 = arith.constant dense<0.000000e+00> : vector<8x32xf32>
    %97 = tpu.matmul %95, %96, %cst_61 {dimension_numbers = #tpu.dot_dimension_numbers<[1], [0], [0], [1], [0, 0, 1, 1], [], []>} : vector<8x128xf32>, vector<128x32xf32>, vector<8x32xf32> -> vector<8x32xf32>
    %c0_62 = arith.constant 0 : index
    %c0_63 = arith.constant 0 : index
    %98 = vector.load %arg17[%c0_62, %c0_63] : memref<1x32xf32, #tpu.memory_space<vmem>>, vector<1x32xf32>
    %99 = vector.broadcast %98 : vector<1x32xf32> to vector<8x32xf32>
    %100 = arith.addf %97, %99 : vector<8x32xf32>
    %101 = arith.addf %60, %100 : vector<8x32xf32>
    %c0_64 = arith.constant 0 : index
    %c0_65 = arith.constant 0 : index
    %c0_66 = arith.constant 0 : index
    %102 = vector.load %arg18[%c0_64, %c0_65, %c0_66] : memref<1x8x32xf32, #tpu.memory_space<vmem>>, vector<1x8x32xf32>
    %103 = vector.shape_cast %102 : vector<1x8x32xf32> to vector<8x32xf32>
    %104 = vector.shape_cast %101 : vector<8x32xf32> to vector<1x8x32xf32>
    tpu.vector_store %arg18[%c0_64, %c0_65, %c0_66], %104 {strides = array<i32>} : memref<1x8x32xf32, #tpu.memory_space<vmem>>, vector<1x8x32xf32>,
    return
  }
  func.func @transform_0(%arg0: i32) -> (i32, i32, i32) {
    %c0_i32 = arith.constant 0 : i32
    %c0_i32_0 = arith.constant 0 : i32
    %c0_i32_1 = arith.constant 0 : i32
    return %arg0, %c0_i32, %c0_i32_0 : i32, i32, i32
  }
  func.func @transform_1(%arg0: i32) -> (i32, i32) {
    %c0_i32 = arith.constant 0 : i32
    %c0_i32_0 = arith.constant 0 : i32
    %c0_i32_1 = arith.constant 0 : i32
    return %c0_i32, %c0_i32_0 : i32, i32
  }
  func.func @transform_2(%arg0: i32) -> (i32, i32) {
    %c0_i32 = arith.constant 0 : i32
    %c0_i32_0 = arith.constant 0 : i32
    %c0_i32_1 = arith.constant 0 : i32
    return %c0_i32, %c0_i32_0 : i32, i32
  }
  func.func @transform_3(%arg0: i32) -> (i32, i32, i32) {
    %c0_i32 = arith.constant 0 : i32
    %c0_i32_0 = arith.constant 0 : i32
    %c0_i32_1 = arith.constant 0 : i32
    %c0_i32_2 = arith.constant 0 : i32
    return %c0_i32, %c0_i32_0, %c0_i32_1 : i32, i32, i32
  }
  func.func @transform_4(%arg0: i32) -> (i32, i32, i32) {
    %c0_i32 = arith.constant 0 : i32
    %c0_i32_0 = arith.constant 0 : i32
    %c0_i32_1 = arith.constant 0 : i32
    %c0_i32_2 = arith.constant 0 : i32
    return %c0_i32, %c0_i32_0, %c0_i32_1 : i32, i32, i32
  }
  func.func @transform_5(%arg0: i32) -> (i32, i32, i32) {
    %c0_i32 = arith.constant 0 : i32
    %c0_i32_0 = arith.constant 0 : i32
    %c0_i32_1 = arith.constant 0 : i32
    %c0_i32_2 = arith.constant 0 : i32
    return %c0_i32, %c0_i32_0, %c0_i32_1 : i32, i32, i32
  }
  func.func @transform_6(%arg0: i32) -> (i32, i32, i32) {
    %c0_i32 = arith.constant 0 : i32
    %c0_i32_0 = arith.constant 0 : i32
    %c0_i32_1 = arith.constant 0 : i32
    %c0_i32_2 = arith.constant 0 : i32
    return %c0_i32, %c0_i32_0, %c0_i32_1 : i32, i32, i32
  }
  func.func @transform_7(%arg0: i32) -> (i32, i32, i32) {
    %c0_i32 = arith.constant 0 : i32
    %c0_i32_0 = arith.constant 0 : i32
    %c0_i32_1 = arith.constant 0 : i32
    %c0_i32_2 = arith.constant 0 : i32
    return %c0_i32, %c0_i32_0, %c0_i32_1 : i32, i32, i32
  }
  func.func @transform_8(%arg0: i32) -> (i32, i32, i32) {
    %c0_i32 = arith.constant 0 : i32
    %c0_i32_0 = arith.constant 0 : i32
    %c0_i32_1 = arith.constant 0 : i32
    %c0_i32_2 = arith.constant 0 : i32
    return %c0_i32, %c0_i32_0, %c0_i32_1 : i32, i32, i32
  }
  func.func @transform_9(%arg0: i32) -> (i32, i32, i32) {
    %c0_i32 = arith.constant 0 : i32
    %c0_i32_0 = arith.constant 0 : i32
    %c0_i32_1 = arith.constant 0 : i32
    %c0_i32_2 = arith.constant 0 : i32
    return %c0_i32, %c0_i32_0, %c0_i32_1 : i32, i32, i32
  }
  func.func @transform_10(%arg0: i32) -> (i32, i32) {
    %c0_i32 = arith.constant 0 : i32
    %c0_i32_0 = arith.constant 0 : i32
    %c0_i32_1 = arith.constant 0 : i32
    return %c0_i32, %c0_i32_0 : i32, i32
  }
  func.func @transform_11(%arg0: i32) -> (i32, i32) {
    %c0_i32 = arith.constant 0 : i32
    %c0_i32_0 = arith.constant 0 : i32
    %c0_i32_1 = arith.constant 0 : i32
    return %c0_i32, %c0_i32_0 : i32, i32
  }
  func.func @transform_12(%arg0: i32) -> (i32, i32) {
    %c0_i32 = arith.constant 0 : i32
    %c0_i32_0 = arith.constant 0 : i32
    %c0_i32_1 = arith.constant 0 : i32
    return %c0_i32, %c0_i32_0 : i32, i32
  }
  func.func @transform_13(%arg0: i32) -> (i32, i32) {
    %c0_i32 = arith.constant 0 : i32
    %c0_i32_0 = arith.constant 0 : i32
    %c0_i32_1 = arith.constant 0 : i32
    return %c0_i32, %c0_i32_0 : i32, i32
  }
  func.func @transform_14(%arg0: i32) -> (i32, i32) {
    %c0_i32 = arith.constant 0 : i32
    %c0_i32_0 = arith.constant 0 : i32
    %c0_i32_1 = arith.constant 0 : i32
    return %c0_i32, %c0_i32_0 : i32, i32
  }
  func.func @transform_15(%arg0: i32) -> (i32, i32) {
    %c0_i32 = arith.constant 0 : i32
    %c0_i32_0 = arith.constant 0 : i32
    %c0_i32_1 = arith.constant 0 : i32
    return %c0_i32, %c0_i32_0 : i32, i32
  }
  func.func @transform_16(%arg0: i32) -> (i32, i32) {
    %c0_i32 = arith.constant 0 : i32
    %c0_i32_0 = arith.constant 0 : i32
    %c0_i32_1 = arith.constant 0 : i32
    return %c0_i32, %c0_i32_0 : i32, i32
  }
  func.func @transform_17(%arg0: i32) -> (i32, i32, i32) {
    %c0_i32 = arith.constant 0 : i32
    %c0_i32_0 = arith.constant 0 : i32
    %c0_i32_1 = arith.constant 0 : i32
    return %arg0, %c0_i32, %c0_i32_0 : i32, i32, i32
  }
}

</mosaic_0001>

<llo_original>
// kernel: tpu_custom_call.1
$region0: #{tpu_custom_call.1}
  #allocation0 [shape = 'u32[]', space=smem, size = 0x4, offset = 0x4, fixed_abs, tag = 'smem constant byte address 0x4 - core index']
  #allocation1 [shape = 'u32[72,128]{1,0:T(1,128)}', space=vmem, size = 0x9000, scoped, tag = 'internal scratch']
  %s0 = inlined_call_operand.vmem [shape: f32[2,8,32], index: 0, kind: input, shape index: {}]
  %s1 = inlined_call_operand.vmem [shape: f32[1,32], index: 1, kind: input, shape index: {}]
  %s2 = inlined_call_operand.vmem [shape: f32[1,32], index: 2, kind: input, shape index: {}]
  %s3 = inlined_call_operand.vmem [shape: f32[8,32,4], index: 3, kind: input, shape index: {}]
  %s4 = inlined_call_operand.vmem [shape: f32[8,32,4], index: 4, kind: input, shape index: {}]
  %s5 = inlined_call_operand.vmem [shape: f32[8,32,4], index: 5, kind: input, shape index: {}]
  %s6 = inlined_call_operand.vmem [shape: f32[8,1,4], index: 6, kind: input, shape index: {}]
  %s7 = inlined_call_operand.vmem [shape: f32[8,1,4], index: 7, kind: input, shape index: {}]
  %s8 = inlined_call_operand.vmem [shape: f32[8,1,4], index: 8, kind: input, shape index: {}]
  %s9 = inlined_call_operand.vmem [shape: f32[8,4,32], index: 9, kind: input, shape index: {}]
  %s10 = inlined_call_operand.vmem [shape: f32[1,32], index: 10, kind: input, shape index: {}]
  %s11 = inlined_call_operand.vmem [shape: f32[1,32], index: 11, kind: input, shape index: {}]
  %s12 = inlined_call_operand.vmem [shape: f32[1,32], index: 12, kind: input, shape index: {}]
  %s13 = inlined_call_operand.vmem [shape: f32[32,128], index: 13, kind: input, shape index: {}]
  %s14 = inlined_call_operand.vmem [shape: f32[1,128], index: 14, kind: input, shape index: {}]
  %s15 = inlined_call_operand.vmem [shape: f32[128,32], index: 15, kind: input, shape index: {}]
  %s16 = inlined_call_operand.vmem [shape: f32[1,32], index: 16, kind: input, shape index: {}]
  %s17 = inlined_call_operand.hbm [shape: f32[2,8,32], index: 17, kind: output, shape index: {}]
  %s18 = sld [smem:[#allocation0]]
  $region101: #{tpu_custom_call.1} parent=0
    _
  %s20 = ssub.s32 1, %s18
  %s21 = scalar_select 0, %s20, %s18
  $region1: #{tpu_custom_call.1} parent=0
    #allocation2 [shape = 'u8[8192]{0}', space=vmem, size = 0x2000, scoped, tag = 'output window, operand 0']
    #allocation3 [shape = 's32[2]{0}', space=sflag, size = 0x8, scoped, tag = 'scoped memory for tpu_custom_call.1']
    %22 = vsyncpa [#allocation3], 0
    %s23 = scalar_lea.sflag [#allocation3], 1
    %24 = vsyncpa %s23, 0
    loop: start=0, step=1, limit=4
    $region2: #{tpu_custom_call.1} parent=1 // loop_pre_header
      _
    $region3: #{tpu_custom_call.1} parent=1 // loop_header
      %s26 = sphi 0, %s30
      %p27 = scmp.ge.s32.totalorder %s26, 4
      %s36 = sphi 0, %s38
      %s39 = sphi 0, %s36
      %s40 = sphi 0, %s39
      %s56 = sphi 0, %s40
      %s60 = sphi 0, %s60
      %s62 = sphi 0, %s60
      %s63 = sphi 0, %s62
      %s77 = sphi 0, %s63
      %s81 = sphi 0, %s81
      %s83 = sphi 0, %s81
      %s84 = sphi 0, %s83
      %s98 = sphi 0, %s84
      %s102 = sphi 0, %s102
      %s104 = sphi 0, %s102
      %s105 = sphi 0, %s104
      %s119 = sphi 0, %s105
      %s123 = sphi 0, %s123
      %s125 = sphi 0, %s123
      %s126 = sphi 0, %s125
      %s140 = sphi 0, %s126
      %s144 = sphi 0, %s144
      %s146 = sphi 0, %s144
      %s147 = sphi 0, %s146
      %s161 = sphi 0, %s147
      %s165 = sphi 0, %s165
      %s167 = sphi 0, %s165
      %s168 = sphi 0, %s167
      %s182 = sphi 0, %s168
      %s186 = sphi 0, %s186
      %s188 = sphi 0, %s186
      %s189 = sphi 0, %s188
      %s203 = sphi 0, %s189
      %s207 = sphi 0, %s207
      %s209 = sphi 0, %s207
      %s210 = sphi 0, %s209
      %s224 = sphi 0, %s210
      %s228 = sphi 0, %s228
      %s230 = sphi 0, %s228
      %s231 = sphi 0, %s230
      %s245 = sphi 0, %s231
      %s249 = sphi 0, %s249
      %s251 = sphi 0, %s249
      %s252 = sphi 0, %s251
      %s266 = sphi 0, %s252
      %s270 = sphi 0, %s270
      %s272 = sphi 0, %s270
      %s273 = sphi 0, %s272
      %s287 = sphi 0, %s273
      %s291 = sphi 0, %s291
      %s293 = sphi 0, %s291
      %s294 = sphi 0, %s293
      %s308 = sphi 0, %s294
      %s312 = sphi 0, %s312
      %s314 = sphi 0, %s312
      %s315 = sphi 0, %s314
      %s329 = sphi 0, %s315
      %s333 = sphi 0, %s333
      %s335 = sphi 0, %s333
      %s336 = sphi 0, %s335
      %s350 = sphi 0, %s336
      %s354 = sphi 0, %s354
      %s356 = sphi 0, %s354
      %s357 = sphi 0, %s356
      %s371 = sphi 0, %s357
      %s375 = sphi 0, %s375
      %s377 = sphi 0, %s375
      %s378 = sphi 0, %s377
      %s392 = sphi 0, %s378
      %s398 = sphi 0, %s400
      %s401 = sphi 0, %s398
      %s402 = sphi 0, %s401
      %s418 = sphi 0, %s402
    $region4: #{tpu_custom_call.1} parent=1 // loop_header_branch
      %29 = sbr.rel (%p27) target = $region8
    $region5: #{tpu_custom_call.1} parent=1 // loop_body
      %s31 = ssub.s32 %s26, 1
      %s32 = ssub.s32 %s26, 2
      %s33 = sadd.s32 %s26, 1
      %s34 = ssub.s32 %s26, %s33
      %p35 = scmp.eq.s32.totalorder %s34, 0
      %s37 = sadd.s32 %s36, 1
      %s38 = scalar_select %p35, %s36, %s37
      %p41 = pneg %p35
      %p42 = scmp.eq.s32.totalorder %s26, 1
      %p43 = por %p41, %p42
      %p44 = scmp.ne.s32.totalorder %s36, %s39
      %p45 = scmp.eq.s32.totalorder %s26, 0
      %p46 = por %p44, %p45
      %p47 = scmp.ne.s32.totalorder %s36, %s39
      %p48 = scmp.eq.s32.totalorder %s31, 1
      %p49 = por %p47, %p48
      %p50 = scmp.ne.s32.totalorder %s39, %s40
      %p51 = scmp.eq.s32.totalorder %s31, 0
      %p52 = por %p50, %p51
      %p53 = scmp.ne.s32.totalorder %s39, %s40
      %p54 = scmp.eq.s32.totalorder %s32, 1
      %p55 = por %p53, %p54
      %p57 = scmp.ne.s32.totalorder %s40, %s56
      %p58 = scmp.eq.s32.totalorder %s32, 0
      %p59 = por %p57, %p58
      %s61 = sadd.s32 %s60, 1
      %p64 = scmp.eq.s32.totalorder %s26, 1
      %p65 = scmp.ne.s32.totalorder %s60, %s62
      %p66 = scmp.eq.s32.totalorder %s26, 0
      %p67 = por %p65, %p66
      %p68 = scmp.ne.s32.totalorder %s60, %s62
      %p69 = scmp.eq.s32.totalorder %s31, 1
      %p70 = por %p68, %p69
      %p71 = scmp.ne.s32.totalorder %s62, %s63
      %p72 = scmp.eq.s32.totalorder %s31, 0
      %p73 = por %p71, %p72
      %p74 = scmp.ne.s32.totalorder %s62, %s63
      %p75 = scmp.eq.s32.totalorder %s32, 1
      %p76 = por %p74, %p75
      %p78 = scmp.ne.s32.totalorder %s63, %s77
      %p79 = scmp.eq.s32.totalorder %s32, 0
      %p80 = por %p78, %p79
      %s82 = sadd.s32 %s81, 1
      %p85 = scmp.eq.s32.totalorder %s26, 1
      %p86 = scmp.ne.s32.totalorder %s81, %s83
      %p87 = scmp.eq.s32.totalorder %s26, 0
      %p88 = por %p86, %p87
      %p89 = scmp.ne.s32.totalorder %s81, %s83
      %p90 = scmp.eq.s32.totalorder %s31, 1
      %p91 = por %p89, %p90
      %p92 = scmp.ne.s32.totalorder %s83, %s84
      %p93 = scmp.eq.s32.totalorder %s31, 0
      %p94 = por %p92, %p93
      %p95 = scmp.ne.s32.totalorder %s83, %s84
      %p96 = scmp.eq.s32.totalorder %s32, 1
      %p97 = por %p95, %p96
      %p99 = scmp.ne.s32.totalorder %s84, %s98
      %p100 = scmp.eq.s32.totalorder %s32, 0
      %p101 = por %p99, %p100
      %s103 = sadd.s32 %s102, 1
      %p106 = scmp.eq.s32.totalorder %s26, 1
      %p107 = scmp.ne.s32.totalorder %s102, %s104
      %p108 = scmp.eq.s32.totalorder %s26, 0
      %p109 = por %p107, %p108
      %p110 = scmp.ne.s32.totalorder %s102, %s104
      %p111 = scmp.eq.s32.totalorder %s31, 1
      %p112 = por %p110, %p111
      %p113 = scmp.ne.s32.totalorder %s104, %s105
      %p114 = scmp.eq.s32.totalorder %s31, 0
      %p115 = por %p113, %p114
      %p116 = scmp.ne.s32.totalorder %s104, %s105
      %p117 = scmp.eq.s32.totalorder %s32, 1
      %p118 = por %p116, %p117
      %p120 = scmp.ne.s32.totalorder %s105, %s119
      %p121 = scmp.eq.s32.totalorder %s32, 0
      %p122 = por %p120, %p121
      %s124 = sadd.s32 %s123, 1
      %p127 = scmp.eq.s32.totalorder %s26, 1
      %p128 = scmp.ne.s32.totalorder %s123, %s125
      %p129 = scmp.eq.s32.totalorder %s26, 0
      %p130 = por %p128, %p129
      %p131 = scmp.ne.s32.totalorder %s123, %s125
      %p132 = scmp.eq.s32.totalorder %s31, 1
      %p133 = por %p131, %p132
      %p134 = scmp.ne.s32.totalorder %s125, %s126
      %p135 = scmp.eq.s32.totalorder %s31, 0
      %p136 = por %p134, %p135
      %p137 = scmp.ne.s32.totalorder %s125, %s126
      %p138 = scmp.eq.s32.totalorder %s32, 1
      %p139 = por %p137, %p138
      %p141 = scmp.ne.s32.totalorder %s126, %s140
      %p142 = scmp.eq.s32.totalorder %s32, 0
      %p143 = por %p141, %p142
      %s145 = sadd.s32 %s144, 1
      %p148 = scmp.eq.s32.totalorder %s26, 1
      %p149 = scmp.ne.s32.totalorder %s144, %s146
      %p150 = scmp.eq.s32.totalorder %s26, 0
      %p151 = por %p149, %p150
      %p152 = scmp.ne.s32.totalorder %s144, %s146
      %p153 = scmp.eq.s32.totalorder %s31, 1
      %p154 = por %p152, %p153
      %p155 = scmp.ne.s32.totalorder %s146, %s147
      %p156 = scmp.eq.s32.totalorder %s31, 0
      %p157 = por %p155, %p156
      %p158 = scmp.ne.s32.totalorder %s146, %s147
      %p159 = scmp.eq.s32.totalorder %s32, 1
      %p160 = por %p158, %p159
      %p162 = scmp.ne.s32.totalorder %s147, %s161
      %p163 = scmp.eq.s32.totalorder %s32, 0
      %p164 = por %p162, %p163
      %s166 = sadd.s32 %s165, 1
      %p169 = scmp.eq.s32.totalorder %s26, 1
      %p170 = scmp.ne.s32.totalorder %s165, %s167
      %p171 = scmp.eq.s32.totalorder %s26, 0
      %p172 = por %p170, %p171
      %p173 = scmp.ne.s32.totalorder %s165, %s167
      %p174 = scmp.eq.s32.totalorder %s31, 1
      %p175 = por %p173, %p174
      %p176 = scmp.ne.s32.totalorder %s167, %s168
      %p177 = scmp.eq.s32.totalorder %s31, 0
      %p178 = por %p176, %p177
      %p179 = scmp.ne.s32.totalorder %s167, %s168
      %p180 = scmp.eq.s32.totalorder %s32, 1
      %p181 = por %p179, %p180
      %p183 = scmp.ne.s32.totalorder %s168, %s182
      %p184 = scmp.eq.s32.totalorder %s32, 0
      %p185 = por %p183, %p184
      %s187 = sadd.s32 %s186, 1
      %p190 = scmp.eq.s32.totalorder %s26, 1
      %p191 = scmp.ne.s32.totalorder %s186, %s188
      %p192 = scmp.eq.s32.totalorder %s26, 0
      %p193 = por %p191, %p192
      %p194 = scmp.ne.s32.totalorder %s186, %s188
      %p195 = scmp.eq.s32.totalorder %s31, 1
      %p196 = por %p194, %p195
      %p197 = scmp.ne.s32.totalorder %s188, %s189
      %p198 = scmp.eq.s32.totalorder %s31, 0
      %p199 = por %p197, %p198
      %p200 = scmp.ne.s32.totalorder %s188, %s189
      %p201 = scmp.eq.s32.totalorder %s32, 1
      %p202 = por %p200, %p201
      %p204 = scmp.ne.s32.totalorder %s189, %s203
      %p205 = scmp.eq.s32.totalorder %s32, 0
      %p206 = por %p204, %p205
      %s208 = sadd.s32 %s207, 1
      %p211 = scmp.eq.s32.totalorder %s26, 1
      %p212 = scmp.ne.s32.totalorder %s207, %s209
      %p213 = scmp.eq.s32.totalorder %s26, 0
      %p214 = por %p212, %p213
      %p215 = scmp.ne.s32.totalorder %s207, %s209
      %p216 = scmp.eq.s32.totalorder %s31, 1
      %p217 = por %p215, %p216
      %p218 = scmp.ne.s32.totalorder %s209, %s210
      %p219 = scmp.eq.s32.totalorder %s31, 0
      %p220 = por %p218, %p219
      %p221 = scmp.ne.s32.totalorder %s209, %s210
      %p222 = scmp.eq.s32.totalorder %s32, 1
      %p223 = por %p221, %p222
      %p225 = scmp.ne.s32.totalorder %s210, %s224
      %p226 = scmp.eq.s32.totalorder %s32, 0
      %p227 = por %p225, %p226
      %s229 = sadd.s32 %s228, 1
      %p232 = scmp.eq.s32.totalorder %s26, 1
      %p233 = scmp.ne.s32.totalorder %s228, %s230
      %p234 = scmp.eq.s32.totalorder %s26, 0
      %p235 = por %p233, %p234
      %p236 = scmp.ne.s32.totalorder %s228, %s230
      %p237 = scmp.eq.s32.totalorder %s31, 1
      %p238 = por %p236, %p237
      %p239 = scmp.ne.s32.totalorder %s230, %s231
      %p240 = scmp.eq.s32.totalorder %s31, 0
      %p241 = por %p239, %p240
      %p242 = scmp.ne.s32.totalorder %s230, %s231
      %p243 = scmp.eq.s32.totalorder %s32, 1
      %p244 = por %p242, %p243
      %p246 = scmp.ne.s32.totalorder %s231, %s245
      %p247 = scmp.eq.s32.totalorder %s32, 0
      %p248 = por %p246, %p247
      %s250 = sadd.s32 %s249, 1
      %p253 = scmp.eq.s32.totalorder %s26, 1
      %p254 = scmp.ne.s32.totalorder %s249, %s251
      %p255 = scmp.eq.s32.totalorder %s26, 0
      %p256 = por %p254, %p255
      %p257 = scmp.ne.s32.totalorder %s249, %s251
      %p258 = scmp.eq.s32.totalorder %s31, 1
      %p259 = por %p257, %p258
      %p260 = scmp.ne.s32.totalorder %s251, %s252
      %p261 = scmp.eq.s32.totalorder %s31, 0
      %p262 = por %p260, %p261
      %p263 = scmp.ne.s32.totalorder %s251, %s252
      %p264 = scmp.eq.s32.totalorder %s32, 1
      %p265 = por %p263, %p264
      %p267 = scmp.ne.s32.totalorder %s252, %s266
      %p268 = scmp.eq.s32.totalorder %s32, 0
      %p269 = por %p267, %p268
      %s271 = sadd.s32 %s270, 1
      %p274 = scmp.eq.s32.totalorder %s26, 1
      %p275 = scmp.ne.s32.totalorder %s270, %s272
      %p276 = scmp.eq.s32.totalorder %s26, 0
      %p277 = por %p275, %p276
      %p278 = scmp.ne.s32.totalorder %s270, %s272
      %p279 = scmp.eq.s32.totalorder %s31, 1
      %p280 = por %p278, %p279
      %p281 = scmp.ne.s32.totalorder %s272, %s273
      %p282 = scmp.eq.s32.totalorder %s31, 0
      %p283 = por %p281, %p282
      %p284 = scmp.ne.s32.totalorder %s272, %s273
      %p285 = scmp.eq.s32.totalorder %s32, 1
      %p286 = por %p284, %p285
      %p288 = scmp.ne.s32.totalorder %s273, %s287
      %p289 = scmp.eq.s32.totalorder %s32, 0
      %p290 = por %p288, %p289
      %s292 = sadd.s32 %s291, 1
      %p295 = scmp.eq.s32.totalorder %s26, 1
      %p296 = scmp.ne.s32.totalorder %s291, %s293
      %p297 = scmp.eq.s32.totalorder %s26, 0
      %p298 = por %p296, %p297
      %p299 = scmp.ne.s32.totalorder %s291, %s293
      %p300 = scmp.eq.s32.totalorder %s31, 1
      %p301 = por %p299, %p300
      %p302 = scmp.ne.s32.totalorder %s293, %s294
      %p303 = scmp.eq.s32.totalorder %s31, 0
      %p304 = por %p302, %p303
      %p305 = scmp.ne.s32.totalorder %s293, %s294
      %p306 = scmp.eq.s32.totalorder %s32, 1
      %p307 = por %p305, %p306
      %p309 = scmp.ne.s32.totalorder %s294, %s308
      %p310 = scmp.eq.s32.totalorder %s32, 0
      %p311 = por %p309, %p310
      %s313 = sadd.s32 %s312, 1
      %p316 = scmp.eq.s32.totalorder %s26, 1
      %p317 = scmp.ne.s32.totalorder %s312, %s314
      %p318 = scmp.eq.s32.totalorder %s26, 0
      %p319 = por %p317, %p318
      %p320 = scmp.ne.s32.totalorder %s312, %s314
      %p321 = scmp.eq.s32.totalorder %s31, 1
      %p322 = por %p320, %p321
      %p323 = scmp.ne.s32.totalorder %s314, %s315
      %p324 = scmp.eq.s32.totalorder %s31, 0
      %p325 = por %p323, %p324
      %p326 = scmp.ne.s32.totalorder %s314, %s315
      %p327 = scmp.eq.s32.totalorder %s32, 1
      %p328 = por %p326, %p327
      %p330 = scmp.ne.s32.totalorder %s315, %s329
      %p331 = scmp.eq.s32.totalorder %s32, 0
      %p332 = por %p330, %p331
      %s334 = sadd.s32 %s333, 1
      %p337 = scmp.eq.s32.totalorder %s26, 1
      %p338 = scmp.ne.s32.totalorder %s333, %s335
      %p339 = scmp.eq.s32.totalorder %s26, 0
      %p340 = por %p338, %p339
      %p341 = scmp.ne.s32.totalorder %s333, %s335
      %p342 = scmp.eq.s32.totalorder %s31, 1
      %p343 = por %p341, %p342
      %p344 = scmp.ne.s32.totalorder %s335, %s336
      %p345 = scmp.eq.s32.totalorder %s31, 0
      %p346 = por %p344, %p345
      %p347 = scmp.ne.s32.totalorder %s335, %s336
      %p348 = scmp.eq.s32.totalorder %s32, 1
      %p349 = por %p347, %p348
      %p351 = scmp.ne.s32.totalorder %s336, %s350
      %p352 = scmp.eq.s32.totalorder %s32, 0
      %p353 = por %p351, %p352
      %s355 = sadd.s32 %s354, 1
      %p358 = scmp.eq.s32.totalorder %s26, 1
      %p359 = scmp.ne.s32.totalorder %s354, %s356
      %p360 = scmp.eq.s32.totalorder %s26, 0
      %p361 = por %p359, %p360
      %p362 = scmp.ne.s32.totalorder %s354, %s356
      %p363 = scmp.eq.s32.totalorder %s31, 1
      %p364 = por %p362, %p363
      %p365 = scmp.ne.s32.totalorder %s356, %s357
      %p366 = scmp.eq.s32.totalorder %s31, 0
      %p367 = por %p365, %p366
      %p368 = scmp.ne.s32.totalorder %s356, %s357
      %p369 = scmp.eq.s32.totalorder %s32, 1
      %p370 = por %p368, %p369
      %p372 = scmp.ne.s32.totalorder %s357, %s371
      %p373 = scmp.eq.s32.totalorder %s32, 0
      %p374 = por %p372, %p373
      %s376 = sadd.s32 %s375, 1
      %p379 = scmp.eq.s32.totalorder %s26, 1
      %p380 = scmp.ne.s32.totalorder %s375, %s377
      %p381 = scmp.eq.s32.totalorder %s26, 0
      %p382 = por %p380, %p381
      %p383 = scmp.ne.s32.totalorder %s375, %s377
      %p384 = scmp.eq.s32.totalorder %s31, 1
      %p385 = por %p383, %p384
      %p386 = scmp.ne.s32.totalorder %s377, %s378
      %p387 = scmp.eq.s32.totalorder %s31, 0
      %p388 = por %p386, %p387
      %p389 = scmp.ne.s32.totalorder %s377, %s378
      %p390 = scmp.eq.s32.totalorder %s32, 1
      %p391 = por %p389, %p390
      %p393 = scmp.ne.s32.totalorder %s378, %s392
      %p394 = scmp.eq.s32.totalorder %s32, 0
      %p395 = por %p393, %p394
      %s396 = ssub.s32 %s26, %s33
      %p397 = scmp.eq.s32.totalorder %s396, 0
      %s399 = sadd.s32 %s398, 1
      %s400 = scalar_select %p397, %s398, %s399
      %p403 = pneg %p397
      %p404 = scmp.eq.s32.totalorder %s26, 1
      %p405 = por %p403, %p404
      %p406 = scmp.ne.s32.totalorder %s398, %s401
      %p407 = scmp.eq.s32.totalorder %s26, 0
      %p408 = por %p406, %p407
      %p409 = scmp.ne.s32.totalorder %s398, %s401
      %p410 = scmp.eq.s32.totalorder %s31, 1
      %p411 = por %p409, %p410
      %p412 = scmp.ne.s32.totalorder %s401, %s402
      %p413 = scmp.eq.s32.totalorder %s31, 0
      %p414 = por %p412, %p413
      %p415 = scmp.ne.s32.totalorder %s401, %s402
      %p416 = scmp.eq.s32.totalorder %s32, 1
      %p417 = por %p415, %p416
      %p419 = scmp.ne.s32.totalorder %s402, %s418
      %p420 = scmp.eq.s32.totalorder %s32, 0
      %p421 = por %p419, %p420
      %p422 = scmp.le.s32.totalorder 1, %s26
      %p423 = scmp.lt.s32.totalorder %s26, 3
      %p424 = pnand %p422, %p423
      %p425 = pneg %p424
      // Predicated region
      $region9: #{tpu_custom_call.1} parent=5 // pred_check
        _
      $region10: #{tpu_custom_call.1} parent=5 // pred_check_branch
        %427 = sbr.rel (%p424) target = $region12
      $region11: #{tpu_custom_call.1} parent=5 // pred_region
        %s428 = ssub.s32 %s26, 1
        // Predicated region
        $region13: #{tpu_custom_call.1} parent=11 // pred_check
          %p429 = pneg %p73
        $region14: #{tpu_custom_call.1} parent=11 // pred_check_branch
          %431 = sbr.rel (%p429) target = $region16
        $region15: #{tpu_custom_call.1} parent=11 // pred_region
          _
        $region16: #{tpu_custom_call.1} parent=11 // pred_fallthru
          _
        // Predicated region
        $region17: #{tpu_custom_call.1} parent=11 // pred_check
          %p432 = pneg %p94
        $region18: #{tpu_custom_call.1} parent=11 // pred_check_branch
          %434 = sbr.rel (%p432) target = $region20
        $region19: #{tpu_custom_call.1} parent=11 // pred_region
          _
        $region20: #{tpu_custom_call.1} parent=11 // pred_fallthru
          _
        // Predicated region
        $region21: #{tpu_custom_call.1} parent=11 // pred_check
          %p435 = pneg %p115
        $region22: #{tpu_custom_call.1} parent=11 // pred_check_branch
          %437 = sbr.rel (%p435) target = $region24
        $region23: #{tpu_custom_call.1} parent=11 // pred_region
          _
        $region24: #{tpu_custom_call.1} parent=11 // pred_fallthru
          _
        // Predicated region
        $region25: #{tpu_custom_call.1} parent=11 // pred_check
          %p438 = pneg %p136
        $region26: #{tpu_custom_call.1} parent=11 // pred_check_branch
          %440 = sbr.rel (%p438) target = $region28
        $region27: #{tpu_custom_call.1} parent=11 // pred_region
          _
        $region28: #{tpu_custom_call.1} parent=11 // pred_fallthru
          _
        // Predicated region
        $region29: #{tpu_custom_call.1} parent=11 // pred_check
          %p441 = pneg %p157
        $region30: #{tpu_custom_call.1} parent=11 // pred_check_branch
          %443 = sbr.rel (%p441) target = $region32
        $region31: #{tpu_custom_call.1} parent=11 // pred_region
          _
        $region32: #{tpu_custom_call.1} parent=11 // pred_fallthru
          _
        // Predicated region
        $region33: #{tpu_custom_call.1} parent=11 // pred_check
          %p444 = pneg %p178
        $region34: #{tpu_custom_call.1} parent=11 // pred_check_branch
          %446 = sbr.rel (%p444) target = $region36
        $region35: #{tpu_custom_call.1} parent=11 // pred_region
          _
        $region36: #{tpu_custom_call.1} parent=11 // pred_fallthru
          _
        // Predicated region
        $region37: #{tpu_custom_call.1} parent=11 // pred_check
          %p447 = pneg %p199
        $region38: #{tpu_custom_call.1} parent=11 // pred_check_branch
          %449 = sbr.rel (%p447) target = $region40
        $region39: #{tpu_custom_call.1} parent=11 // pred_region
          _
        $region40: #{tpu_custom_call.1} parent=11 // pred_fallthru
          _
        // Predicated region
        $region41: #{tpu_custom_call.1} parent=11 // pred_check
          %p450 = pneg %p220
        $region42: #{tpu_custom_call.1} parent=11 // pred_check_branch
          %452 = sbr.rel (%p450) target = $region44
        $region43: #{tpu_custom_call.1} parent=11 // pred_region
          _
        $region44: #{tpu_custom_call.1} parent=11 // pred_fallthru
          _
        // Predicated region
        $region45: #{tpu_custom_call.1} parent=11 // pred_check
          %p453 = pneg %p241
        $region46: #{tpu_custom_call.1} parent=11 // pred_check_branch
          %455 = sbr.rel (%p453) target = $region48
        $region47: #{tpu_custom_call.1} parent=11 // pred_region
          _
        $region48: #{tpu_custom_call.1} parent=11 // pred_fallthru
          _
        // Predicated region
        $region49: #{tpu_custom_call.1} parent=11 // pred_check
          %p456 = pneg %p262
        $region50: #{tpu_custom_call.1} parent=11 // pred_check_branch
          %458 = sbr.rel (%p456) target = $region52
        $region51: #{tpu_custom_call.1} parent=11 // pred_region
          _
        $region52: #{tpu_custom_call.1} parent=11 // pred_fallthru
          _
        // Predicated region
        $region53: #{tpu_custom_call.1} parent=11 // pred_check
          %p459 = pneg %p283
        $region54: #{tpu_custom_call.1} parent=11 // pred_check_branch
          %461 = sbr.rel (%p459) target = $region56
        $region55: #{tpu_custom_call.1} parent=11 // pred_region
          _
        $region56: #{tpu_custom_call.1} parent=11 // pred_fallthru
          _
        // Predicated region
        $region57: #{tpu_custom_call.1} parent=11 // pred_check
          %p462 = pneg %p304
        $region58: #{tpu_custom_call.1} parent=11 // pred_check_branch
          %464 = sbr.rel (%p462) target = $region60
        $region59: #{tpu_custom_call.1} parent=11 // pred_region
          _
        $region60: #{tpu_custom_call.1} parent=11 // pred_fallthru
          _
        // Predicated region
        $region61: #{tpu_custom_call.1} parent=11 // pred_check
          %p465 = pneg %p325
        $region62: #{tpu_custom_call.1} parent=11 // pred_check_branch
          %467 = sbr.rel (%p465) target = $region64
        $region63: #{tpu_custom_call.1} parent=11 // pred_region
          _
        $region64: #{tpu_custom_call.1} parent=11 // pred_fallthru
          _
        // Predicated region
        $region65: #{tpu_custom_call.1} parent=11 // pred_check
          %p468 = pneg %p346
        $region66: #{tpu_custom_call.1} parent=11 // pred_check_branch
          %470 = sbr.rel (%p468) target = $region68
        $region67: #{tpu_custom_call.1} parent=11 // pred_region
          _
        $region68: #{tpu_custom_call.1} parent=11 // pred_fallthru
          _
        // Predicated region
        $region69: #{tpu_custom_call.1} parent=11 // pred_check
          %p471 = pneg %p367
        $region70: #{tpu_custom_call.1} parent=11 // pred_check_branch
          %473 = sbr.rel (%p471) target = $region72
        $region71: #{tpu_custom_call.1} parent=11 // pred_region
          _
        $region72: #{tpu_custom_call.1} parent=11 // pred_fallthru
          _
        // Predicated region
        $region73: #{tpu_custom_call.1} parent=11 // pred_check
          %p474 = pneg %p388
        $region74: #{tpu_custom_call.1} parent=11 // pred_check_branch
          %476 = sbr.rel (%p474) target = $region76
        $region75: #{tpu_custom_call.1} parent=11 // pred_region
          _
        $region76: #{tpu_custom_call.1} parent=11 // pred_fallthru
          _
      $region12: #{tpu_custom_call.1} parent=5 // pred_fallthru
        _
      %p477 = scmp.lt.s32.totalorder %s26, 2
      // Predicated region
      $region77: #{tpu_custom_call.1} parent=5 // pred_check
        %p478 = pneg %p477
      $region78: #{tpu_custom_call.1} parent=5 // pred_check_branch
        %480 = sbr.rel (%p478) target = $region80
      $region79: #{tpu_custom_call.1} parent=5 // pred_region
        // Predicated region
        $region81: #{tpu_custom_call.1} parent=79 // pred_check
          %p481 = pneg %p46
        $region82: #{tpu_custom_call.1} parent=79 // pred_check_branch
          %483 = sbr.rel (%p481) target = $region84
        $region83: #{tpu_custom_call.1} parent=79 // pred_region
          %p484 = scmp.lt.s32.totalorder %s26, 1
          %s485 = scalar_select %p484, %s26, 1
          %s486 = smul.addr %s485, 8
          %s487 = scalar_lea.vmem %s0, %s486
        $region84: #{tpu_custom_call.1} parent=79 // pred_fallthru
          _
      $region80: #{tpu_custom_call.1} parent=5 // pred_fallthru
        _
      %p488 = scmp.le.s32.totalorder 1, %s26
      %p489 = scmp.lt.s32.totalorder %s26, 3
      %p490 = pnand %p488, %p489
      %p491 = pneg %p490
      // Predicated region
      $region85: #{tpu_custom_call.1} parent=5 // pred_check
        _
      $region86: #{tpu_custom_call.1} parent=5 // pred_check_branch
        %493 = sbr.rel (%p490) target = $region88
      $region87: #{tpu_custom_call.1} parent=5 // pred_region
        %s494 = ssub.s32 %s26, 1
        %p495 = scmp.lt.s32.totalorder %s31, 1
        %s496 = scalar_select %p495, %s31, 1
        %s497 = smul.addr %s496, 8
        %s498 = scalar_lea.vmem %s0, %s497
        %p499 = pneg %p52
        %p500 = pneg %p49
        %p501 = pneg %p73
        %p502 = pneg %p70
        %p503 = pneg %p94
        %p504 = pneg %p91
        %p505 = pneg %p115
        %p506 = pneg %p112
        %p507 = pneg %p136
        %p508 = pneg %p133
        %p509 = pneg %p157
        %p510 = pneg %p154
        %p511 = pneg %p178
        %p512 = pneg %p175
        %p513 = pneg %p199
        %p514 = pneg %p196
        %p515 = pneg %p220
        %p516 = pneg %p217
        %p517 = pneg %p241
        %p518 = pneg %p238
        %p519 = pneg %p262
        %p520 = pneg %p259
        %p521 = pneg %p283
        %p522 = pneg %p280
        %p523 = pneg %p304
        %p524 = pneg %p301
        %p525 = pneg %p325
        %p526 = pneg %p322
        %p527 = pneg %p346
        %p528 = pneg %p343
        %p529 = pneg %p367
        %p530 = pneg %p364
        %p531 = pneg %p388
        %p532 = pneg %p385
        %p533 = pneg %p414
        %p534 = pneg %p411
        %s535 = sand.u32 %s401, 1
        %s536 = scalar_lea.sflag [#allocation3], %s535
        %s537 = sand.u32 %s401, 1
        %s538 = smul.addr %s537, 8
        %s539 = scalar_lea.vmem [#allocation2], %s538
        %p540 = scmp.lt.s32.totalorder %s31, 1
        %s541 = scalar_select %p540, %s31, 1
        %s542 = smul.addr %s541, 8
        %s543 = scalar_lea.vmem %s0, %s542
        %v544 = vld [vmem:[%s543] sm:$0xff]
        %v545 = vld [vmem:[%s1] sm:$0x1]
        %v546 = vld [vmem:[%s2] sm:$0x1]
        %vm547 = vcmask 261120
        %v548 = vsel %vm547, %v544, 0.0
        %549 = vadd.xlane.f32.xlu0 %v548
        %v550 = vpop.xlane.xlu0 %549
        %v551 = vrcp.pop 32.0
        %v552 = vmul.f32 32.0, %v551
        %v553 = vsub.f32 1.0, %v552
        %v554 = vmul.f32 %v551, %v553
        %v555 = vadd.f32 %v551, %v554
        %vm556 = vweird.f32 %v551
        %v557 = vsel %vm556, %v551, %v555
        %v558 = vmul.f32 %v550, %v557
        %v559 = vsub.f32 %v544, %v558
        %v560 = vmul.f32 %v559, %v559
        %v561 = vsel %vm547, %v560, 0.0
        %562 = vadd.xlane.f32.xlu0 %v561
        %v563 = vpop.xlane.xlu0 %562
        %v564 = vmul.f32 %v563, %v557
        %v565 = vadd.f32 %v564, 1e-05
        %v566 = vrsqrt.pop %v565
        %v567 = vmul.f32 %v566, %v565
        %v568 = vmul.f32 %v567, %v566
        %v569 = vmul.f32 0.5, %v568
        %v570 = vsub.f32 1.5, %v569
        %v571 = vmul.f32 %v566, %v570
        %vm572 = vweird.f32 %v565
        %vm573 = vweird.f32 %v566
        %vm574 = vmor %vm572, %vm573
        %v575 = vsel %vm574, %v566, %v571
        %v576 = vmul.f32 %v559, %v575
        %v578 = vperm.slane %v545, 0
        %v580 = vmul.f32 %v576, %v578
        %v582 = vperm.slane %v546, 0
        %v584 = vadd.f32 %v580, %v582
        %v585 = vld [vmem:[%s3] sm:$0xff]
        %v586 = vld [vmem:[%s3 + $0x8] sm:$0xff]
        %v587 = vld [vmem:[%s3 + $0x10] sm:$0xff]
        %v588 = vld [vmem:[%s3 + $0x18] sm:$0xff]
        %v589 = vld [vmem:[%s3 + $0x20] sm:$0xff]
        %v590 = vld [vmem:[%s3 + $0x28] sm:$0xff]
        %v591 = vld [vmem:[%s3 + $0x30] sm:$0xff]
        %v592 = vld [vmem:[%s3 + $0x38] sm:$0xff]
        %v593 = vld [vmem:[%s3 + $0x40] sm:$0xff]
        %v594 = vld [vmem:[%s3 + $0x48] sm:$0xff]
        %v595 = vld [vmem:[%s3 + $0x50] sm:$0xff]
        %v596 = vld [vmem:[%s3 + $0x58] sm:$0xff]
        %v597 = vld [vmem:[%s3 + $0x60] sm:$0xff]
        %v598 = vld [vmem:[%s3 + $0x68] sm:$0xff]
        %v599 = vld [vmem:[%s3 + $0x70] sm:$0xff]
        %v600 = vld [vmem:[%s3 + $0x78] sm:$0xff]
        %v601 = vld [vmem:[%s3 + $0x80] sm:$0xff]
        %v602 = vld [vmem:[%s3 + $0x88] sm:$0xff]
        %v603 = vld [vmem:[%s3 + $0x90] sm:$0xff]
        %v604 = vld [vmem:[%s3 + $0x98] sm:$0xff]
        %v605 = vld [vmem:[%s3 + $0xa0] sm:$0xff]
        %v606 = vld [vmem:[%s3 + $0xa8] sm:$0xff]
        %v607 = vld [vmem:[%s3 + $0xb0] sm:$0xff]
        %v608 = vld [vmem:[%s3 + $0xb8] sm:$0xff]
        %v609 = vld [vmem:[%s3 + $0xc0] sm:$0xff]
        %v610 = vld [vmem:[%s3 + $0xc8] sm:$0xff]
        %v611 = vld [vmem:[%s3 + $0xd0] sm:$0xff]
        %v612 = vld [vmem:[%s3 + $0xd8] sm:$0xff]
        %v613 = vld [vmem:[%s3 + $0xe0] sm:$0xff]
        %v614 = vld [vmem:[%s3 + $0xe8] sm:$0xff]
        %v615 = vld [vmem:[%s3 + $0xf0] sm:$0xff]
        %v616 = vld [vmem:[%s3 + $0xf8] sm:$0xff]
        %v617 = vld [vmem:[%s6] sm:$0x1]
        %v618 = vld [vmem:[%s6 + $0x1] sm:$0x1]
        %v619 = vld [vmem:[%s6 + $0x2] sm:$0x1]
        %v620 = vld [vmem:[%s6 + $0x3] sm:$0x1]
        %v621 = vld [vmem:[%s6 + $0x4] sm:$0x1]
        %v622 = vld [vmem:[%s6 + $0x5] sm:$0x1]
        %v623 = vld [vmem:[%s6 + $0x6] sm:$0x1]
        %v624 = vld [vmem:[%s6 + $0x7] sm:$0x1]
        %v633 = vperm.slane %v617, 0
        %v634 = vperm.slane %v618, 0
        %v635 = vperm.slane %v619, 0
        %v636 = vperm.slane %v620, 0
        %v637 = vperm.slane %v621, 0
        %v638 = vperm.slane %v622, 0
        %v639 = vperm.slane %v623, 0
        %v640 = vperm.slane %v624, 0
        %v650 = vsel %vm547, %v584, 0
        %652 = vmatpush.msra.mxu0 0.0
        %653 = vmatpush.msra.mxu0 0.0
        %654 = vmatpush.msra.mxu0 0.0
        %655 = vmatpush.msra.mxu0 0.0
        %656 = vmatpush.msra.mxu0 0.0
        %657 = vmatpush.msra.mxu0 0.0
        %658 = vmatpush.msra.mxu0 0.0
        %659 = vmatpush.msra.mxu0 0.0
        %660 = vmatpush.msra.mxu0 0.0
        %661 = vmatpush.msra.mxu0 0.0
        %662 = vmatpush.msra.mxu0 0.0
        %663 = vmatpush.msra.mxu0 0.0
        %664 = vmatpush.msra.mxu0 %v588
        %665 = vmatpush.msra.mxu0 %v587
        %666 = vmatpush.msra.mxu0 %v586
        %667 = vmatpush.msra.mxu0 %v585
        %668 = vmatmul.f32.gmra.mxu0 %v650
        %v669 = vpop.f32.mrf.mxu0
        %v670 = vadd.f32 %v633, %v669
        %671 = vdwg.mxu0
        %672 = vmatpush.msra.mxu0 0.0
        %673 = vmatpush.msra.mxu0 0.0
        %674 = vmatpush.msra.mxu0 0.0
        %675 = vmatpush.msra.mxu0 0.0
        %676 = vmatpush.msra.mxu0 0.0
        %677 = vmatpush.msra.mxu0 0.0
        %678 = vmatpush.msra.mxu0 0.0
        %679 = vmatpush.msra.mxu0 0.0
        %680 = vmatpush.msra.mxu0 0.0
        %681 = vmatpush.msra.mxu0 0.0
        %682 = vmatpush.msra.mxu0 0.0
        %683 = vmatpush.msra.mxu0 0.0
        %684 = vmatpush.msra.mxu0 %v592
        %685 = vmatpush.msra.mxu0 %v591
        %686 = vmatpush.msra.mxu0 %v590
        %687 = vmatpush.msra.mxu0 %v589
        %688 = vmatmul.f32.gmra.mxu0 %v650
        %v689 = vpop.f32.mrf.mxu0
        %v690 = vadd.f32 %v634, %v689
        %691 = vdwg.mxu0
        %692 = vmatpush.msra.mxu0 0.0
        %693 = vmatpush.msra.mxu0 0.0
        %694 = vmatpush.msra.mxu0 0.0
        %695 = vmatpush.msra.mxu0 0.0
        %696 = vmatpush.msra.mxu0 0.0
        %697 = vmatpush.msra.mxu0 0.0
        %698 = vmatpush.msra.mxu0 0.0
        %699 = vmatpush.msra.mxu0 0.0
        %700 = vmatpush.msra.mxu0 0.0
        %701 = vmatpush.msra.mxu0 0.0
        %702 = vmatpush.msra.mxu0 0.0
        %703 = vmatpush.msra.mxu0 0.0
        %704 = vmatpush.msra.mxu0 %v596
        %705 = vmatpush.msra.mxu0 %v595
        %706 = vmatpush.msra.mxu0 %v594
        %707 = vmatpush.msra.mxu0 %v593
        %708 = vmatmul.f32.gmra.mxu0 %v650
        %v709 = vpop.f32.mrf.mxu0
        %v710 = vadd.f32 %v635, %v709
        %711 = vdwg.mxu0
        %712 = vmatpush.msra.mxu0 0.0
        %713 = vmatpush.msra.mxu0 0.0
        %714 = vmatpush.msra.mxu0 0.0
        %715 = vmatpush.msra.mxu0 0.0
        %716 = vmatpush.msra.mxu0 0.0
        %717 = vmatpush.msra.mxu0 0.0
        %718 = vmatpush.msra.mxu0 0.0
        %719 = vmatpush.msra.mxu0 0.0
        %720 = vmatpush.msra.mxu0 0.0
        %721 = vmatpush.msra.mxu0 0.0
        %722 = vmatpush.msra.mxu0 0.0
        %723 = vmatpush.msra.mxu0 0.0
        %724 = vmatpush.msra.mxu0 %v600
        %725 = vmatpush.msra.mxu0 %v599
        %726 = vmatpush.msra.mxu0 %v598
        %727 = vmatpush.msra.mxu0 %v597
        %728 = vmatmul.f32.gmra.mxu0 %v650
        %v729 = vpop.f32.mrf.mxu0
        %v730 = vadd.f32 %v636, %v729
        %731 = vdwg.mxu0
        %732 = vmatpush.msra.mxu0 0.0
        %733 = vmatpush.msra.mxu0 0.0
        %734 = vmatpush.msra.mxu0 0.0
        %735 = vmatpush.msra.mxu0 0.0
        %736 = vmatpush.msra.mxu0 0.0
        %737 = vmatpush.msra.mxu0 0.0
        %738 = vmatpush.msra.mxu0 0.0
        %739 = vmatpush.msra.mxu0 0.0
        %740 = vmatpush.msra.mxu0 0.0
        %741 = vmatpush.msra.mxu0 0.0
        %742 = vmatpush.msra.mxu0 0.0
        %743 = vmatpush.msra.mxu0 0.0
        %744 = vmatpush.msra.mxu0 %v604
        %745 = vmatpush.msra.mxu0 %v603
        %746 = vmatpush.msra.mxu0 %v602
        %747 = vmatpush.msra.mxu0 %v601
        %748 = vmatmul.f32.gmra.mxu0 %v650
        %v749 = vpop.f32.mrf.mxu0
        %v750 = vadd.f32 %v637, %v749
        %751 = vdwg.mxu0
        %752 = vmatpush.msra.mxu0 0.0
        %753 = vmatpush.msra.mxu0 0.0
        %754 = vmatpush.msra.mxu0 0.0
        %755 = vmatpush.msra.mxu0 0.0
        %756 = vmatpush.msra.mxu0 0.0
        %757 = vmatpush.msra.mxu0 0.0
        %758 = vmatpush.msra.mxu0 0.0
        %759 = vmatpush.msra.mxu0 0.0
        %760 = vmatpush.msra.mxu0 0.0
        %761 = vmatpush.msra.mxu0 0.0
        %762 = vmatpush.msra.mxu0 0.0
        %763 = vmatpush.msra.mxu0 0.0
        %764 = vmatpush.msra.mxu0 %v608
        %765 = vmatpush.msra.mxu0 %v607
        %766 = vmatpush.msra.mxu0 %v606
        %767 = vmatpush.msra.mxu0 %v605
        %768 = vmatmul.f32.gmra.mxu0 %v650
        %v769 = vpop.f32.mrf.mxu0
        %v770 = vadd.f32 %v638, %v769
        %771 = vdwg.mxu0
        %772 = vmatpush.msra.mxu0 0.0
        %773 = vmatpush.msra.mxu0 0.0
        %774 = vmatpush.msra.mxu0 0.0
        %775 = vmatpush.msra.mxu0 0.0
        %776 = vmatpush.msra.mxu0 0.0
        %777 = vmatpush.msra.mxu0 0.0
        %778 = vmatpush.msra.mxu0 0.0
        %779 = vmatpush.msra.mxu0 0.0
        %780 = vmatpush.msra.mxu0 0.0
        %781 = vmatpush.msra.mxu0 0.0
        %782 = vmatpush.msra.mxu0 0.0
        %783 = vmatpush.msra.mxu0 0.0
        %784 = vmatpush.msra.mxu0 %v612
        %785 = vmatpush.msra.mxu0 %v611
        %786 = vmatpush.msra.mxu0 %v610
        %787 = vmatpush.msra.mxu0 %v609
        %788 = vmatmul.f32.gmra.mxu0 %v650
        %v789 = vpop.f32.mrf.mxu0
        %v790 = vadd.f32 %v639, %v789
        %791 = vdwg.mxu0
        %792 = vmatpush.msra.mxu0 0.0
        %793 = vmatpush.msra.mxu0 0.0
        %794 = vmatpush.msra.mxu0 0.0
        %795 = vmatpush.msra.mxu0 0.0
        %796 = vmatpush.msra.mxu0 0.0
        %797 = vmatpush.msra.mxu0 0.0
        %798 = vmatpush.msra.mxu0 0.0
        %799 = vmatpush.msra.mxu0 0.0
        %800 = vmatpush.msra.mxu0 0.0
        %801 = vmatpush.msra.mxu0 0.0
        %802 = vmatpush.msra.mxu0 0.0
        %803 = vmatpush.msra.mxu0 0.0
        %804 = vmatpush.msra.mxu0 %v616
        %805 = vmatpush.msra.mxu0 %v615
        %806 = vmatpush.msra.mxu0 %v614
        %807 = vmatpush.msra.mxu0 %v613
        %808 = vmatmul.f32.gmra.mxu0 %v650
        %v809 = vpop.f32.mrf.mxu0
        %v810 = vadd.f32 %v640, %v809
        %811 = vdwg.mxu0
        %v812 = vld [vmem:[%s4] sm:$0xff]
        %v813 = vld [vmem:[%s4 + $0x8] sm:$0xff]
        %v814 = vld [vmem:[%s4 + $0x10] sm:$0xff]
        %v815 = vld [vmem:[%s4 + $0x18] sm:$0xff]
        %v816 = vld [vmem:[%s4 + $0x20] sm:$0xff]
        %v817 = vld [vmem:[%s4 + $0x28] sm:$0xff]
        %v818 = vld [vmem:[%s4 + $0x30] sm:$0xff]
        %v819 = vld [vmem:[%s4 + $0x38] sm:$0xff]
        %v820 = vld [vmem:[%s4 + $0x40] sm:$0xff]
        %v821 = vld [vmem:[%s4 + $0x48] sm:$0xff]
        %v822 = vld [vmem:[%s4 + $0x50] sm:$0xff]
        %v823 = vld [vmem:[%s4 + $0x58] sm:$0xff]
        %v824 = vld [vmem:[%s4 + $0x60] sm:$0xff]
        %v825 = vld [vmem:[%s4 + $0x68] sm:$0xff]
        %v826 = vld [vmem:[%s4 + $0x70] sm:$0xff]
        %v827 = vld [vmem:[%s4 + $0x78] sm:$0xff]
        %v828 = vld [vmem:[%s4 + $0x80] sm:$0xff]
        %v829 = vld [vmem:[%s4 + $0x88] sm:$0xff]
        %v830 = vld [vmem:[%s4 + $0x90] sm:$0xff]
        %v831 = vld [vmem:[%s4 + $0x98] sm:$0xff]
        %v832 = vld [vmem:[%s4 + $0xa0] sm:$0xff]
        %v833 = vld [vmem:[%s4 + $0xa8] sm:$0xff]
        %v834 = vld [vmem:[%s4 + $0xb0] sm:$0xff]
        %v835 = vld [vmem:[%s4 + $0xb8] sm:$0xff]
        %v836 = vld [vmem:[%s4 + $0xc0] sm:$0xff]
        %v837 = vld [vmem:[%s4 + $0xc8] sm:$0xff]
        %v838 = vld [vmem:[%s4 + $0xd0] sm:$0xff]
        %v839 = vld [vmem:[%s4 + $0xd8] sm:$0xff]
        %v840 = vld [vmem:[%s4 + $0xe0] sm:$0xff]
        %v841 = vld [vmem:[%s4 + $0xe8] sm:$0xff]
        %v842 = vld [vmem:[%s4 + $0xf0] sm:$0xff]
        %v843 = vld [vmem:[%s4 + $0xf8] sm:$0xff]
        %v844 = vld [vmem:[%s7] sm:$0x1]
        %v845 = vld [vmem:[%s7 + $0x1] sm:$0x1]
        %v846 = vld [vmem:[%s7 + $0x2] sm:$0x1]
        %v847 = vld [vmem:[%s7 + $0x3] sm:$0x1]
        %v848 = vld [vmem:[%s7 + $0x4] sm:$0x1]
        %v849 = vld [vmem:[%s7 + $0x5] sm:$0x1]
        %v850 = vld [vmem:[%s7 + $0x6] sm:$0x1]
        %v851 = vld [vmem:[%s7 + $0x7] sm:$0x1]
        %v860 = vperm.slane %v844, 0
        %v861 = vperm.slane %v845, 0
        %v862 = vperm.slane %v846, 0
        %v863 = vperm.slane %v847, 0
        %v864 = vperm.slane %v848, 0
        %v865 = vperm.slane %v849, 0
        %v866 = vperm.slane %v850, 0
        %v867 = vperm.slane %v851, 0
        %876 = vmatpush.msra.mxu0 0.0
        %877 = vmatpush.msra.mxu0 0.0
        %878 = vmatpush.msra.mxu0 0.0
        %879 = vmatpush.msra.mxu0 0.0
        %880 = vmatpush.msra.mxu0 0.0
        %881 = vmatpush.msra.mxu0 0.0
        %882 = vmatpush.msra.mxu0 0.0
        %883 = vmatpush.msra.mxu0 0.0
        %884 = vmatpush.msra.mxu0 0.0
        %885 = vmatpush.msra.mxu0 0.0
        %886 = vmatpush.msra.mxu0 0.0
        %887 = vmatpush.msra.mxu0 0.0
        %888 = vmatpush.msra.mxu0 %v815
        %889 = vmatpush.msra.mxu0 %v814
        %890 = vmatpush.msra.mxu0 %v813
        %891 = vmatpush.msra.mxu0 %v812
        %892 = vmatmul.f32.gmra.mxu0 %v650
        %v893 = vpop.f32.mrf.mxu0
        %v894 = vadd.f32 %v860, %v893
        %895 = vdwg.mxu0
        %896 = vmatpush.msra.mxu0 0.0
        %897 = vmatpush.msra.mxu0 0.0
        %898 = vmatpush.msra.mxu0 0.0
        %899 = vmatpush.msra.mxu0 0.0
        %900 = vmatpush.msra.mxu0 0.0
        %901 = vmatpush.msra.mxu0 0.0
        %902 = vmatpush.msra.mxu0 0.0
        %903 = vmatpush.msra.mxu0 0.0
        %904 = vmatpush.msra.mxu0 0.0
        %905 = vmatpush.msra.mxu0 0.0
        %906 = vmatpush.msra.mxu0 0.0
        %907 = vmatpush.msra.mxu0 0.0
        %908 = vmatpush.msra.mxu0 %v819
        %909 = vmatpush.msra.mxu0 %v818
        %910 = vmatpush.msra.mxu0 %v817
        %911 = vmatpush.msra.mxu0 %v816
        %912 = vmatmul.f32.gmra.mxu0 %v650
        %v913 = vpop.f32.mrf.mxu0
        %v914 = vadd.f32 %v861, %v913
        %915 = vdwg.mxu0
        %916 = vmatpush.msra.mxu0 0.0
        %917 = vmatpush.msra.mxu0 0.0
        %918 = vmatpush.msra.mxu0 0.0
        %919 = vmatpush.msra.mxu0 0.0
        %920 = vmatpush.msra.mxu0 0.0
        %921 = vmatpush.msra.mxu0 0.0
        %922 = vmatpush.msra.mxu0 0.0
        %923 = vmatpush.msra.mxu0 0.0
        %924 = vmatpush.msra.mxu0 0.0
        %925 = vmatpush.msra.mxu0 0.0
        %926 = vmatpush.msra.mxu0 0.0
        %927 = vmatpush.msra.mxu0 0.0
        %928 = vmatpush.msra.mxu0 %v823
        %929 = vmatpush.msra.mxu0 %v822
        %930 = vmatpush.msra.mxu0 %v821
        %931 = vmatpush.msra.mxu0 %v820
        %932 = vmatmul.f32.gmra.mxu0 %v650
        %v933 = vpop.f32.mrf.mxu0
        %v934 = vadd.f32 %v862, %v933
        %935 = vdwg.mxu0
        %936 = vmatpush.msra.mxu0 0.0
        %937 = vmatpush.msra.mxu0 0.0
        %938 = vmatpush.msra.mxu0 0.0
        %939 = vmatpush.msra.mxu0 0.0
        %940 = vmatpush.msra.mxu0 0.0
        %941 = vmatpush.msra.mxu0 0.0
        %942 = vmatpush.msra.mxu0 0.0
        %943 = vmatpush.msra.mxu0 0.0
        %944 = vmatpush.msra.mxu0 0.0
        %945 = vmatpush.msra.mxu0 0.0
        %946 = vmatpush.msra.mxu0 0.0
        %947 = vmatpush.msra.mxu0 0.0
        %948 = vmatpush.msra.mxu0 %v827
        %949 = vmatpush.msra.mxu0 %v826
        %950 = vmatpush.msra.mxu0 %v825
        %951 = vmatpush.msra.mxu0 %v824
        %952 = vmatmul.f32.gmra.mxu0 %v650
        %v953 = vpop.f32.mrf.mxu0
        %v954 = vadd.f32 %v863, %v953
        %955 = vdwg.mxu0
        %956 = vmatpush.msra.mxu0 0.0
        %957 = vmatpush.msra.mxu0 0.0
        %958 = vmatpush.msra.mxu0 0.0
        %959 = vmatpush.msra.mxu0 0.0
        %960 = vmatpush.msra.mxu0 0.0
        %961 = vmatpush.msra.mxu0 0.0
        %962 = vmatpush.msra.mxu0 0.0
        %963 = vmatpush.msra.mxu0 0.0
        %964 = vmatpush.msra.mxu0 0.0
        %965 = vmatpush.msra.mxu0 0.0
        %966 = vmatpush.msra.mxu0 0.0
        %967 = vmatpush.msra.mxu0 0.0
        %968 = vmatpush.msra.mxu0 %v831
        %969 = vmatpush.msra.mxu0 %v830
        %970 = vmatpush.msra.mxu0 %v829
        %971 = vmatpush.msra.mxu0 %v828
        %972 = vmatmul.f32.gmra.mxu0 %v650
        %v973 = vpop.f32.mrf.mxu0
        %v974 = vadd.f32 %v864, %v973
        %975 = vdwg.mxu0
        %976 = vmatpush.msra.mxu0 0.0
        %977 = vmatpush.msra.mxu0 0.0
        %978 = vmatpush.msra.mxu0 0.0
        %979 = vmatpush.msra.mxu0 0.0
        %980 = vmatpush.msra.mxu0 0.0
        %981 = vmatpush.msra.mxu0 0.0
        %982 = vmatpush.msra.mxu0 0.0
        %983 = vmatpush.msra.mxu0 0.0
        %984 = vmatpush.msra.mxu0 0.0
        %985 = vmatpush.msra.mxu0 0.0
        %986 = vmatpush.msra.mxu0 0.0
        %987 = vmatpush.msra.mxu0 0.0
        %988 = vmatpush.msra.mxu0 %v835
        %989 = vmatpush.msra.mxu0 %v834
        %990 = vmatpush.msra.mxu0 %v833
        %991 = vmatpush.msra.mxu0 %v832
        %992 = vmatmul.f32.gmra.mxu0 %v650
        %v993 = vpop.f32.mrf.mxu0
        %v994 = vadd.f32 %v865, %v993
        %995 = vdwg.mxu0
        %996 = vmatpush.msra.mxu0 0.0
        %997 = vmatpush.msra.mxu0 0.0
        %998 = vmatpush.msra.mxu0 0.0
        %999 = vmatpush.msra.mxu0 0.0
        %1000 = vmatpush.msra.mxu0 0.0
        %1001 = vmatpush.msra.mxu0 0.0
        %1002 = vmatpush.msra.mxu0 0.0
        %1003 = vmatpush.msra.mxu0 0.0
        %1004 = vmatpush.msra.mxu0 0.0
        %1005 = vmatpush.msra.mxu0 0.0
        %1006 = vmatpush.msra.mxu0 0.0
        %1007 = vmatpush.msra.mxu0 0.0
        %1008 = vmatpush.msra.mxu0 %v839
        %1009 = vmatpush.msra.mxu0 %v838
        %1010 = vmatpush.msra.mxu0 %v837
        %1011 = vmatpush.msra.mxu0 %v836
        %1012 = vmatmul.f32.gmra.mxu0 %v650
        %v1013 = vpop.f32.mrf.mxu0
        %v1014 = vadd.f32 %v866, %v1013
        %1015 = vdwg.mxu0
        %1016 = vmatpush.msra.mxu0 0.0
        %1017 = vmatpush.msra.mxu0 0.0
        %1018 = vmatpush.msra.mxu0 0.0
        %1019 = vmatpush.msra.mxu0 0.0
        %1020 = vmatpush.msra.mxu0 0.0
        %1021 = vmatpush.msra.mxu0 0.0
        %1022 = vmatpush.msra.mxu0 0.0
        %1023 = vmatpush.msra.mxu0 0.0
        %1024 = vmatpush.msra.mxu0 0.0
        %1025 = vmatpush.msra.mxu0 0.0
        %1026 = vmatpush.msra.mxu0 0.0
        %1027 = vmatpush.msra.mxu0 0.0
        %1028 = vmatpush.msra.mxu0 %v843
        %1029 = vmatpush.msra.mxu0 %v842
        %1030 = vmatpush.msra.mxu0 %v841
        %1031 = vmatpush.msra.mxu0 %v840
        %1032 = vmatmul.f32.gmra.mxu0 %v650
        %v1033 = vpop.f32.mrf.mxu0
        %v1034 = vadd.f32 %v867, %v1033
        %1035 = vdwg.mxu0
        %v1036 = vld [vmem:[%s5] sm:$0xff]
        %v1037 = vld [vmem:[%s5 + $0x8] sm:$0xff]
        %v1038 = vld [vmem:[%s5 + $0x10] sm:$0xff]
        %v1039 = vld [vmem:[%s5 + $0x18] sm:$0xff]
        %v1040 = vld [vmem:[%s5 + $0x20] sm:$0xff]
        %v1041 = vld [vmem:[%s5 + $0x28] sm:$0xff]
        %v1042 = vld [vmem:[%s5 + $0x30] sm:$0xff]
        %v1043 = vld [vmem:[%s5 + $0x38] sm:$0xff]
        %v1044 = vld [vmem:[%s5 + $0x40] sm:$0xff]
        %v1045 = vld [vmem:[%s5 + $0x48] sm:$0xff]
        %v1046 = vld [vmem:[%s5 + $0x50] sm:$0xff]
        %v1047 = vld [vmem:[%s5 + $0x58] sm:$0xff]
        %v1048 = vld [vmem:[%s5 + $0x60] sm:$0xff]
        %v1049 = vld [vmem:[%s5 + $0x68] sm:$0xff]
        %v1050 = vld [vmem:[%s5 + $0x70] sm:$0xff]
        %v1051 = vld [vmem:[%s5 + $0x78] sm:$0xff]
        %v1052 = vld [vmem:[%s5 + $0x80] sm:$0xff]
        %v1053 = vld [vmem:[%s5 + $0x88] sm:$0xff]
        %v1054 = vld [vmem:[%s5 + $0x90] sm:$0xff]
        %v1055 = vld [vmem:[%s5 + $0x98] sm:$0xff]
        %v1056 = vld [vmem:[%s5 + $0xa0] sm:$0xff]
        %v1057 = vld [vmem:[%s5 + $0xa8] sm:$0xff]
        %v1058 = vld [vmem:[%s5 + $0xb0] sm:$0xff]
        %v1059 = vld [vmem:[%s5 + $0xb8] sm:$0xff]
        %v1060 = vld [vmem:[%s5 + $0xc0] sm:$0xff]
        %v1061 = vld [vmem:[%s5 + $0xc8] sm:$0xff]
        %v1062 = vld [vmem:[%s5 + $0xd0] sm:$0xff]
        %v1063 = vld [vmem:[%s5 + $0xd8] sm:$0xff]
        %v1064 = vld [vmem:[%s5 + $0xe0] sm:$0xff]
        %v1065 = vld [vmem:[%s5 + $0xe8] sm:$0xff]
        %v1066 = vld [vmem:[%s5 + $0xf0] sm:$0xff]
        %v1067 = vld [vmem:[%s5 + $0xf8] sm:$0xff]
        %v1068 = vld [vmem:[%s8] sm:$0x1]
        %v1069 = vld [vmem:[%s8 + $0x1] sm:$0x1]
        %v1070 = vld [vmem:[%s8 + $0x2] sm:$0x1]
        %v1071 = vld [vmem:[%s8 + $0x3] sm:$0x1]
        %v1072 = vld [vmem:[%s8 + $0x4] sm:$0x1]
        %v1073 = vld [vmem:[%s8 + $0x5] sm:$0x1]
        %v1074 = vld [vmem:[%s8 + $0x6] sm:$0x1]
        %v1075 = vld [vmem:[%s8 + $0x7] sm:$0x1]
        %v1084 = vperm.slane %v1068, 0
        %v1085 = vperm.slane %v1069, 0
        %v1086 = vperm.slane %v1070, 0
        %v1087 = vperm.slane %v1071, 0
        %v1088 = vperm.slane %v1072, 0
        %v1089 = vperm.slane %v1073, 0
        %v1090 = vperm.slane %v1074, 0
        %v1091 = vperm.slane %v1075, 0
        %1100 = vmatpush.msra.mxu0 0.0
        %1101 = vmatpush.msra.mxu0 0.0
        %1102 = vmatpush.msra.mxu0 0.0
        %1103 = vmatpush.msra.mxu0 0.0
        %1104 = vmatpush.msra.mxu0 0.0
        %1105 = vmatpush.msra.mxu0 0.0
        %1106 = vmatpush.msra.mxu0 0.0
        %1107 = vmatpush.msra.mxu0 0.0
        %1108 = vmatpush.msra.mxu0 0.0
        %1109 = vmatpush.msra.mxu0 0.0
        %1110 = vmatpush.msra.mxu0 0.0
        %1111 = vmatpush.msra.mxu0 0.0
        %1112 = vmatpush.msra.mxu0 %v1039
        %1113 = vmatpush.msra.mxu0 %v1038
        %1114 = vmatpush.msra.mxu0 %v1037
        %1115 = vmatpush.msra.mxu0 %v1036
        %1116 = vmatmul.f32.gmra.mxu0 %v650
        %v1117 = vpop.f32.mrf.mxu0
        %v1118 = vadd.f32 %v1084, %v1117
        %1119 = vdwg.mxu0
        %1120 = vmatpush.msra.mxu0 0.0
        %1121 = vmatpush.msra.mxu0 0.0
        %1122 = vmatpush.msra.mxu0 0.0
        %1123 = vmatpush.msra.mxu0 0.0
        %1124 = vmatpush.msra.mxu0 0.0
        %1125 = vmatpush.msra.mxu0 0.0
        %1126 = vmatpush.msra.mxu0 0.0
        %1127 = vmatpush.msra.mxu0 0.0
        %1128 = vmatpush.msra.mxu0 0.0
        %1129 = vmatpush.msra.mxu0 0.0
        %1130 = vmatpush.msra.mxu0 0.0
        %1131 = vmatpush.msra.mxu0 0.0
        %1132 = vmatpush.msra.mxu0 %v1043
        %1133 = vmatpush.msra.mxu0 %v1042
        %1134 = vmatpush.msra.mxu0 %v1041
        %1135 = vmatpush.msra.mxu0 %v1040
        %1136 = vmatmul.f32.gmra.mxu0 %v650
        %v1137 = vpop.f32.mrf.mxu0
        %v1138 = vadd.f32 %v1085, %v1137
        %1139 = vdwg.mxu0
        %1140 = vmatpush.msra.mxu0 0.0
        %1141 = vmatpush.msra.mxu0 0.0
        %1142 = vmatpush.msra.mxu0 0.0
        %1143 = vmatpush.msra.mxu0 0.0
        %1144 = vmatpush.msra.mxu0 0.0
        %1145 = vmatpush.msra.mxu0 0.0
        %1146 = vmatpush.msra.mxu0 0.0
        %1147 = vmatpush.msra.mxu0 0.0
        %1148 = vmatpush.msra.mxu0 0.0
        %1149 = vmatpush.msra.mxu0 0.0
        %1150 = vmatpush.msra.mxu0 0.0
        %1151 = vmatpush.msra.mxu0 0.0
        %1152 = vmatpush.msra.mxu0 %v1047
        %1153 = vmatpush.msra.mxu0 %v1046
        %1154 = vmatpush.msra.mxu0 %v1045
        %1155 = vmatpush.msra.mxu0 %v1044
        %1156 = vmatmul.f32.gmra.mxu0 %v650
        %v1157 = vpop.f32.mrf.mxu0
        %v1158 = vadd.f32 %v1086, %v1157
        %1159 = vdwg.mxu0
        %1160 = vmatpush.msra.mxu0 0.0
        %1161 = vmatpush.msra.mxu0 0.0
        %1162 = vmatpush.msra.mxu0 0.0
        %1163 = vmatpush.msra.mxu0 0.0
        %1164 = vmatpush.msra.mxu0 0.0
        %1165 = vmatpush.msra.mxu0 0.0
        %1166 = vmatpush.msra.mxu0 0.0
        %1167 = vmatpush.msra.mxu0 0.0
        %1168 = vmatpush.msra.mxu0 0.0
        %1169 = vmatpush.msra.mxu0 0.0
        %1170 = vmatpush.msra.mxu0 0.0
        %1171 = vmatpush.msra.mxu0 0.0
        %1172 = vmatpush.msra.mxu0 %v1051
        %1173 = vmatpush.msra.mxu0 %v1050
        %1174 = vmatpush.msra.mxu0 %v1049
        %1175 = vmatpush.msra.mxu0 %v1048
        %1176 = vmatmul.f32.gmra.mxu0 %v650
        %v1177 = vpop.f32.mrf.mxu0
        %v1178 = vadd.f32 %v1087, %v1177
        %1179 = vdwg.mxu0
        %1180 = vmatpush.msra.mxu0 0.0
        %1181 = vmatpush.msra.mxu0 0.0
        %1182 = vmatpush.msra.mxu0 0.0
        %1183 = vmatpush.msra.mxu0 0.0
        %1184 = vmatpush.msra.mxu0 0.0
        %1185 = vmatpush.msra.mxu0 0.0
        %1186 = vmatpush.msra.mxu0 0.0
        %1187 = vmatpush.msra.mxu0 0.0
        %1188 = vmatpush.msra.mxu0 0.0
        %1189 = vmatpush.msra.mxu0 0.0
        %1190 = vmatpush.msra.mxu0 0.0
        %1191 = vmatpush.msra.mxu0 0.0
        %1192 = vmatpush.msra.mxu0 %v1055
        %1193 = vmatpush.msra.mxu0 %v1054
        %1194 = vmatpush.msra.mxu0 %v1053
        %1195 = vmatpush.msra.mxu0 %v1052
        %1196 = vmatmul.f32.gmra.mxu0 %v650
        %v1197 = vpop.f32.mrf.mxu0
        %v1198 = vadd.f32 %v1088, %v1197
        %1199 = vdwg.mxu0
        %1200 = vmatpush.msra.mxu0 0.0
        %1201 = vmatpush.msra.mxu0 0.0
        %1202 = vmatpush.msra.mxu0 0.0
        %1203 = vmatpush.msra.mxu0 0.0
        %1204 = vmatpush.msra.mxu0 0.0
        %1205 = vmatpush.msra.mxu0 0.0
        %1206 = vmatpush.msra.mxu0 0.0
        %1207 = vmatpush.msra.mxu0 0.0
        %1208 = vmatpush.msra.mxu0 0.0
        %1209 = vmatpush.msra.mxu0 0.0
        %1210 = vmatpush.msra.mxu0 0.0
        %1211 = vmatpush.msra.mxu0 0.0
        %1212 = vmatpush.msra.mxu0 %v1059
        %1213 = vmatpush.msra.mxu0 %v1058
        %1214 = vmatpush.msra.mxu0 %v1057
        %1215 = vmatpush.msra.mxu0 %v1056
        %1216 = vmatmul.f32.gmra.mxu0 %v650
        %v1217 = vpop.f32.mrf.mxu0
        %v1218 = vadd.f32 %v1089, %v1217
        %1219 = vdwg.mxu0
        %1220 = vmatpush.msra.mxu0 0.0
        %1221 = vmatpush.msra.mxu0 0.0
        %1222 = vmatpush.msra.mxu0 0.0
        %1223 = vmatpush.msra.mxu0 0.0
        %1224 = vmatpush.msra.mxu0 0.0
        %1225 = vmatpush.msra.mxu0 0.0
        %1226 = vmatpush.msra.mxu0 0.0
        %1227 = vmatpush.msra.mxu0 0.0
        %1228 = vmatpush.msra.mxu0 0.0
        %1229 = vmatpush.msra.mxu0 0.0
        %1230 = vmatpush.msra.mxu0 0.0
        %1231 = vmatpush.msra.mxu0 0.0
        %1232 = vmatpush.msra.mxu0 %v1063
        %1233 = vmatpush.msra.mxu0 %v1062
        %1234 = vmatpush.msra.mxu0 %v1061
        %1235 = vmatpush.msra.mxu0 %v1060
        %1236 = vmatmul.f32.gmra.mxu0 %v650
        %v1237 = vpop.f32.mrf.mxu0
        %v1238 = vadd.f32 %v1090, %v1237
        %1239 = vdwg.mxu0
        %1240 = vmatpush.msra.mxu0 0.0
        %1241 = vmatpush.msra.mxu0 0.0
        %1242 = vmatpush.msra.mxu0 0.0
        %1243 = vmatpush.msra.mxu0 0.0
        %1244 = vmatpush.msra.mxu0 0.0
        %1245 = vmatpush.msra.mxu0 0.0
        %1246 = vmatpush.msra.mxu0 0.0
        %1247 = vmatpush.msra.mxu0 0.0
        %1248 = vmatpush.msra.mxu0 0.0
        %1249 = vmatpush.msra.mxu0 0.0
        %1250 = vmatpush.msra.mxu0 0.0
        %1251 = vmatpush.msra.mxu0 0.0
        %1252 = vmatpush.msra.mxu0 %v1067
        %1253 = vmatpush.msra.mxu0 %v1066
        %1254 = vmatpush.msra.mxu0 %v1065
        %1255 = vmatpush.msra.mxu0 %v1064
        %1256 = vmatmul.f32.gmra.mxu0 %v650
        %v1257 = vpop.f32.mrf.mxu0
        %v1258 = vadd.f32 %v1091, %v1257
        %1259 = vdwg.mxu0
        %vm1260 = vcmask 31744
        %v1262 = vsel %vm1260, %v670, 0
        %v1265 = vsel %vm1260, %v894, 0
        %1267 = vmatpush.xpose.msra.mxu0 0.0
        %1268 = vmatpush.xpose.msra.mxu0 0.0
        %1269 = vmatpush.xpose.msra.mxu0 0.0
        %1270 = vmatpush.xpose.msra.mxu0 0.0
        %1271 = vmatpush.xpose.msra.mxu0 0.0
        %1272 = vmatpush.xpose.msra.mxu0 0.0
        %1273 = vmatpush.xpose.msra.mxu0 0.0
        %1274 = vmatpush.xpose.msra.mxu0 0.0
        %1275 = vmatpush.xpose.msra.mxu0 0.0
        %1276 = vmatpush.xpose.msra.mxu0 0.0
        %1277 = vmatpush.xpose.msra.mxu0 0.0
        %1278 = vmatpush.xpose.msra.mxu0 0.0
        %1279 = vmatpush.xpose.msra.mxu0 0.0
        %1280 = vmatpush.xpose.msra.mxu0 0.0
        %1281 = vmatpush.xpose.msra.mxu0 0.0
        %1282 = vmatpush.xpose.msra.mxu0 %v1265
        %1283 = vmatmul.f32.gmra.mxu0 %v1262
        %v1284 = vpop.f32.mrf.mxu0
        %v1285 = vadd.f32 0.0, %v1284
        %1286 = vdwg.mxu0
        %v1288 = vsel %vm1260, %v690, 0
        %v1291 = vsel %vm1260, %v914, 0
        %1293 = vmatpush.xpose.msra.mxu0 0.0
        %1294 = vmatpush.xpose.msra.mxu0 0.0
        %1295 = vmatpush.xpose.msra.mxu0 0.0
        %1296 = vmatpush.xpose.msra.mxu0 0.0
        %1297 = vmatpush.xpose.msra.mxu0 0.0
        %1298 = vmatpush.xpose.msra.mxu0 0.0
        %1299 = vmatpush.xpose.msra.mxu0 0.0
        %1300 = vmatpush.xpose.msra.mxu0 0.0
        %1301 = vmatpush.xpose.msra.mxu0 0.0
        %1302 = vmatpush.xpose.msra.mxu0 0.0
        %1303 = vmatpush.xpose.msra.mxu0 0.0
        %1304 = vmatpush.xpose.msra.mxu0 0.0
        %1305 = vmatpush.xpose.msra.mxu0 0.0
        %1306 = vmatpush.xpose.msra.mxu0 0.0
        %1307 = vmatpush.xpose.msra.mxu0 0.0
        %1308 = vmatpush.xpose.msra.mxu0 %v1291
        %1309 = vmatmul.f32.gmra.mxu0 %v1288
        %v1310 = vpop.f32.mrf.mxu0
        %v1311 = vadd.f32 0.0, %v1310
        %1312 = vdwg.mxu0
        %v1314 = vsel %vm1260, %v710, 0
        %v1317 = vsel %vm1260, %v934, 0
        %1319 = vmatpush.xpose.msra.mxu0 0.0
        %1320 = vmatpush.xpose.msra.mxu0 0.0
        %1321 = vmatpush.xpose.msra.mxu0 0.0
        %1322 = vmatpush.xpose.msra.mxu0 0.0
        %1323 = vmatpush.xpose.msra.mxu0 0.0
        %1324 = vmatpush.xpose.msra.mxu0 0.0
        %1325 = vmatpush.xpose.msra.mxu0 0.0
        %1326 = vmatpush.xpose.msra.mxu0 0.0
        %1327 = vmatpush.xpose.msra.mxu0 0.0
        %1328 = vmatpush.xpose.msra.mxu0 0.0
        %1329 = vmatpush.xpose.msra.mxu0 0.0
        %1330 = vmatpush.xpose.msra.mxu0 0.0
        %1331 = vmatpush.xpose.msra.mxu0 0.0
        %1332 = vmatpush.xpose.msra.mxu0 0.0
        %1333 = vmatpush.xpose.msra.mxu0 0.0
        %1334 = vmatpush.xpose.msra.mxu0 %v1317
        %1335 = vmatmul.f32.gmra.mxu0 %v1314
        %v1336 = vpop.f32.mrf.mxu0
        %v1337 = vadd.f32 0.0, %v1336
        %1338 = vdwg.mxu0
        %v1340 = vsel %vm1260, %v730, 0
        %v1343 = vsel %vm1260, %v954, 0
        %1345 = vmatpush.xpose.msra.mxu0 0.0
        %1346 = vmatpush.xpose.msra.mxu0 0.0
        %1347 = vmatpush.xpose.msra.mxu0 0.0
        %1348 = vmatpush.xpose.msra.mxu0 0.0
        %1349 = vmatpush.xpose.msra.mxu0 0.0
        %1350 = vmatpush.xpose.msra.mxu0 0.0
        %1351 = vmatpush.xpose.msra.mxu0 0.0
        %1352 = vmatpush.xpose.msra.mxu0 0.0
        %1353 = vmatpush.xpose.msra.mxu0 0.0
        %1354 = vmatpush.xpose.msra.mxu0 0.0
        %1355 = vmatpush.xpose.msra.mxu0 0.0
        %1356 = vmatpush.xpose.msra.mxu0 0.0
        %1357 = vmatpush.xpose.msra.mxu0 0.0
        %1358 = vmatpush.xpose.msra.mxu0 0.0
        %1359 = vmatpush.xpose.msra.mxu0 0.0
        %1360 = vmatpush.xpose.msra.mxu0 %v1343
        %1361 = vmatmul.f32.gmra.mxu0 %v1340
        %v1362 = vpop.f32.mrf.mxu0
        %v1363 = vadd.f32 0.0, %v1362
        %1364 = vdwg.mxu0
        %v1366 = vsel %vm1260, %v750, 0
        %v1369 = vsel %vm1260, %v974, 0
        %1371 = vmatpush.xpose.msra.mxu0 0.0
        %1372 = vmatpush.xpose.msra.mxu0 0.0
        %1373 = vmatpush.xpose.msra.mxu0 0.0
        %1374 = vmatpush.xpose.msra.mxu0 0.0
        %1375 = vmatpush.xpose.msra.mxu0 0.0
        %1376 = vmatpush.xpose.msra.mxu0 0.0
        %1377 = vmatpush.xpose.msra.mxu0 0.0
        %1378 = vmatpush.xpose.msra.mxu0 0.0
        %1379 = vmatpush.xpose.msra.mxu0 0.0
        %1380 = vmatpush.xpose.msra.mxu0 0.0
        %1381 = vmatpush.xpose.msra.mxu0 0.0
        %1382 = vmatpush.xpose.msra.mxu0 0.0
        %1383 = vmatpush.xpose.msra.mxu0 0.0
        %1384 = vmatpush.xpose.msra.mxu0 0.0
        %1385 = vmatpush.xpose.msra.mxu0 0.0
        %1386 = vmatpush.xpose.msra.mxu0 %v1369
        %1387 = vmatmul.f32.gmra.mxu0 %v1366
        %v1388 = vpop.f32.mrf.mxu0
        %v1389 = vadd.f32 0.0, %v1388
        %1390 = vdwg.mxu0
        %v1392 = vsel %vm1260, %v770, 0
        %v1395 = vsel %vm1260, %v994, 0
        %1397 = vmatpush.xpose.msra.mxu0 0.0
        %1398 = vmatpush.xpose.msra.mxu0 0.0
        %1399 = vmatpush.xpose.msra.mxu0 0.0
        %1400 = vmatpush.xpose.msra.mxu0 0.0
        %1401 = vmatpush.xpose.msra.mxu0 0.0
        %1402 = vmatpush.xpose.msra.mxu0 0.0
        %1403 = vmatpush.xpose.msra.mxu0 0.0
        %1404 = vmatpush.xpose.msra.mxu0 0.0
        %1405 = vmatpush.xpose.msra.mxu0 0.0
        %1406 = vmatpush.xpose.msra.mxu0 0.0
        %1407 = vmatpush.xpose.msra.mxu0 0.0
        %1408 = vmatpush.xpose.msra.mxu0 0.0
        %1409 = vmatpush.xpose.msra.mxu0 0.0
        %1410 = vmatpush.xpose.msra.mxu0 0.0
        %1411 = vmatpush.xpose.msra.mxu0 0.0
        %1412 = vmatpush.xpose.msra.mxu0 %v1395
        %1413 = vmatmul.f32.gmra.mxu0 %v1392
        %v1414 = vpop.f32.mrf.mxu0
        %v1415 = vadd.f32 0.0, %v1414
        %1416 = vdwg.mxu0
        %v1418 = vsel %vm1260, %v790, 0
        %v1421 = vsel %vm1260, %v1014, 0
        %1423 = vmatpush.xpose.msra.mxu0 0.0
        %1424 = vmatpush.xpose.msra.mxu0 0.0
        %1425 = vmatpush.xpose.msra.mxu0 0.0
        %1426 = vmatpush.xpose.msra.mxu0 0.0
        %1427 = vmatpush.xpose.msra.mxu0 0.0
        %1428 = vmatpush.xpose.msra.mxu0 0.0
        %1429 = vmatpush.xpose.msra.mxu0 0.0
        %1430 = vmatpush.xpose.msra.mxu0 0.0
        %1431 = vmatpush.xpose.msra.mxu0 0.0
        %1432 = vmatpush.xpose.msra.mxu0 0.0
        %1433 = vmatpush.xpose.msra.mxu0 0.0
        %1434 = vmatpush.xpose.msra.mxu0 0.0
        %1435 = vmatpush.xpose.msra.mxu0 0.0
        %1436 = vmatpush.xpose.msra.mxu0 0.0
        %1437 = vmatpush.xpose.msra.mxu0 0.0
        %1438 = vmatpush.xpose.msra.mxu0 %v1421
        %1439 = vmatmul.f32.gmra.mxu0 %v1418
        %v1440 = vpop.f32.mrf.mxu0
        %v1441 = vadd.f32 0.0, %v1440
        %1442 = vdwg.mxu0
        %v1444 = vsel %vm1260, %v810, 0
        %v1447 = vsel %vm1260, %v1034, 0
        %1449 = vmatpush.xpose.msra.mxu0 0.0
        %1450 = vmatpush.xpose.msra.mxu0 0.0
        %1451 = vmatpush.xpose.msra.mxu0 0.0
        %1452 = vmatpush.xpose.msra.mxu0 0.0
        %1453 = vmatpush.xpose.msra.mxu0 0.0
        %1454 = vmatpush.xpose.msra.mxu0 0.0
        %1455 = vmatpush.xpose.msra.mxu0 0.0
        %1456 = vmatpush.xpose.msra.mxu0 0.0
        %1457 = vmatpush.xpose.msra.mxu0 0.0
        %1458 = vmatpush.xpose.msra.mxu0 0.0
        %1459 = vmatpush.xpose.msra.mxu0 0.0
        %1460 = vmatpush.xpose.msra.mxu0 0.0
        %1461 = vmatpush.xpose.msra.mxu0 0.0
        %1462 = vmatpush.xpose.msra.mxu0 0.0
        %1463 = vmatpush.xpose.msra.mxu0 0.0
        %1464 = vmatpush.xpose.msra.mxu0 %v1447
        %1465 = vmatmul.f32.gmra.mxu0 %v1444
        %v1466 = vpop.f32.mrf.mxu0
        %v1467 = vadd.f32 0.0, %v1466
        %1468 = vdwg.mxu0
        %vm1469 = vcmask 64512
        %v1470 = vsel %vm1469, %v1285, -inf
        %1471 = vmax.xlane.f32.xlu0 %v1470
        %v1472 = vpop.xlane.xlu0 %1471
        %v1473 = vsel %vm1469, %v1311, -inf
        %1474 = vmax.xlane.f32.xlu0 %v1473
        %v1475 = vpop.xlane.xlu0 %1474
        %v1476 = vsel %vm1469, %v1337, -inf
        %1477 = vmax.xlane.f32.xlu0 %v1476
        %v1478 = vpop.xlane.xlu0 %1477
        %v1479 = vsel %vm1469, %v1363, -inf
        %1480 = vmax.xlane.f32.xlu0 %v1479
        %v1481 = vpop.xlane.xlu0 %1480
        %v1482 = vsel %vm1469, %v1389, -inf
        %1483 = vmax.xlane.f32.xlu0 %v1482
        %v1484 = vpop.xlane.xlu0 %1483
        %v1485 = vsel %vm1469, %v1415, -inf
        %1486 = vmax.xlane.f32.xlu0 %v1485
        %v1487 = vpop.xlane.xlu0 %1486
        %v1488 = vsel %vm1469, %v1441, -inf
        %1489 = vmax.xlane.f32.xlu0 %v1488
        %v1490 = vpop.xlane.xlu0 %1489
        %v1491 = vsel %vm1469, %v1467, -inf
        %1492 = vmax.xlane.f32.xlu0 %v1491
        %v1493 = vpop.xlane.xlu0 %1492
        %v1494 = vsub.f32 %v1285, %v1472
        %v1495 = vsub.f32 %v1311, %v1475
        %v1496 = vsub.f32 %v1337, %v1478
        %v1497 = vsub.f32 %v1363, %v1481
        %v1498 = vsub.f32 %v1389, %v1484
        %v1499 = vsub.f32 %v1415, %v1487
        %v1500 = vsub.f32 %v1441, %v1490
        %v1501 = vsub.f32 %v1467, %v1493
        %v1502 = vmul.f32 %v1494, 1.442695
        %v1503 = vpow.pop %v1502
        %v1504 = vmul.f32 %v1495, 1.442695
        %v1505 = vpow.pop %v1504
        %v1506 = vmul.f32 %v1496, 1.442695
        %v1507 = vpow.pop %v1506
        %v1508 = vmul.f32 %v1497, 1.442695
        %v1509 = vpow.pop %v1508
        %v1510 = vmul.f32 %v1498, 1.442695
        %v1511 = vpow.pop %v1510
        %v1512 = vmul.f32 %v1499, 1.442695
        %v1513 = vpow.pop %v1512
        %v1514 = vmul.f32 %v1500, 1.442695
        %v1515 = vpow.pop %v1514
        %v1516 = vmul.f32 %v1501, 1.442695
        %v1517 = vpow.pop %v1516
        %v1518 = vsel %vm1469, %v1503, 0.0
        %1519 = vadd.xlane.f32.xlu0 %v1518
        %v1520 = vpop.xlane.xlu0 %1519
        %v1521 = vsel %vm1469, %v1505, 0.0
        %1522 = vadd.xlane.f32.xlu0 %v1521
        %v1523 = vpop.xlane.xlu0 %1522
        %v1524 = vsel %vm1469, %v1507, 0.0
        %1525 = vadd.xlane.f32.xlu0 %v1524
        %v1526 = vpop.xlane.xlu0 %1525
        %v1527 = vsel %vm1469, %v1509, 0.0
        %1528 = vadd.xlane.f32.xlu0 %v1527
        %v1529 = vpop.xlane.xlu0 %1528
        %v1530 = vsel %vm1469, %v1511, 0.0
        %1531 = vadd.xlane.f32.xlu0 %v1530
        %v1532 = vpop.xlane.xlu0 %1531
        %v1533 = vsel %vm1469, %v1513, 0.0
        %1534 = vadd.xlane.f32.xlu0 %v1533
        %v1535 = vpop.xlane.xlu0 %1534
        %v1536 = vsel %vm1469, %v1515, 0.0
        %1537 = vadd.xlane.f32.xlu0 %v1536
        %v1538 = vpop.xlane.xlu0 %1537
        %v1539 = vsel %vm1469, %v1517, 0.0
        %1540 = vadd.xlane.f32.xlu0 %v1539
        %v1541 = vpop.xlane.xlu0 %1540
        %v1542 = vrcp.pop %v1520
        %v1543 = vrcp.pop %v1523
        %v1544 = vrcp.pop %v1526
        %v1545 = vrcp.pop %v1529
        %v1546 = vrcp.pop %v1532
        %v1547 = vrcp.pop %v1535
        %v1548 = vrcp.pop %v1538
        %v1549 = vrcp.pop %v1541
        %v1550 = vmul.f32 %v1503, %v1542
        %v1551 = vmul.f32 %v1505, %v1543
        %v1552 = vmul.f32 %v1507, %v1544
        %v1553 = vmul.f32 %v1509, %v1545
        %v1554 = vmul.f32 %v1511, %v1546
        %v1555 = vmul.f32 %v1513, %v1547
        %v1556 = vmul.f32 %v1515, %v1548
        %v1557 = vmul.f32 %v1517, %v1549
        %v1559 = vsel %vm1469, %v1550, 0
        %1561 = vmatpush.msra.mxu0 0.0
        %1562 = vmatpush.msra.mxu0 0.0
        %1563 = vmatpush.msra.mxu0 0.0
        %1564 = vmatpush.msra.mxu0 0.0
        %1565 = vmatpush.msra.mxu0 0.0
        %1566 = vmatpush.msra.mxu0 0.0
        %1567 = vmatpush.msra.mxu0 0.0
        %1568 = vmatpush.msra.mxu0 0.0
        %1569 = vmatpush.msra.mxu0 0.0
        %1570 = vmatpush.msra.mxu0 0.0
        %1571 = vmatpush.msra.mxu0 0.0
        %1572 = vmatpush.msra.mxu0 0.0
        %1573 = vmatpush.msra.mxu0 0.0
        %1574 = vmatpush.msra.mxu0 0.0
        %1575 = vmatpush.msra.mxu0 0.0
        %1576 = vmatpush.msra.mxu0 %v1118
        %1577 = vmatmul.f32.gmra.mxu0 %v1559
        %v1578 = vpop.f32.mrf.mxu0
        %v1579 = vadd.f32 0.0, %v1578
        %1580 = vdwg.mxu0
        %v1582 = vsel %vm1469, %v1551, 0
        %1584 = vmatpush.msra.mxu0 0.0
        %1585 = vmatpush.msra.mxu0 0.0
        %1586 = vmatpush.msra.mxu0 0.0
        %1587 = vmatpush.msra.mxu0 0.0
        %1588 = vmatpush.msra.mxu0 0.0
        %1589 = vmatpush.msra.mxu0 0.0
        %1590 = vmatpush.msra.mxu0 0.0
        %1591 = vmatpush.msra.mxu0 0.0
        %1592 = vmatpush.msra.mxu0 0.0
        %1593 = vmatpush.msra.mxu0 0.0
        %1594 = vmatpush.msra.mxu0 0.0
        %1595 = vmatpush.msra.mxu0 0.0
        %1596 = vmatpush.msra.mxu0 0.0
        %1597 = vmatpush.msra.mxu0 0.0
        %1598 = vmatpush.msra.mxu0 0.0
        %1599 = vmatpush.msra.mxu0 %v1138
        %1600 = vmatmul.f32.gmra.mxu0 %v1582
        %v1601 = vpop.f32.mrf.mxu0
        %v1602 = vadd.f32 0.0, %v1601
        %1603 = vdwg.mxu0
        %v1605 = vsel %vm1469, %v1552, 0
        %1607 = vmatpush.msra.mxu0 0.0
        %1608 = vmatpush.msra.mxu0 0.0
        %1609 = vmatpush.msra.mxu0 0.0
        %1610 = vmatpush.msra.mxu0 0.0
        %1611 = vmatpush.msra.mxu0 0.0
        %1612 = vmatpush.msra.mxu0 0.0
        %1613 = vmatpush.msra.mxu0 0.0
        %1614 = vmatpush.msra.mxu0 0.0
        %1615 = vmatpush.msra.mxu0 0.0
        %1616 = vmatpush.msra.mxu0 0.0
        %1617 = vmatpush.msra.mxu0 0.0
        %1618 = vmatpush.msra.mxu0 0.0
        %1619 = vmatpush.msra.mxu0 0.0
        %1620 = vmatpush.msra.mxu0 0.0
        %1621 = vmatpush.msra.mxu0 0.0
        %1622 = vmatpush.msra.mxu0 %v1158
        %1623 = vmatmul.f32.gmra.mxu0 %v1605
        %v1624 = vpop.f32.mrf.mxu0
        %v1625 = vadd.f32 0.0, %v1624
        %1626 = vdwg.mxu0
        %v1628 = vsel %vm1469, %v1553, 0
        %1630 = vmatpush.msra.mxu0 0.0
        %1631 = vmatpush.msra.mxu0 0.0
        %1632 = vmatpush.msra.mxu0 0.0
        %1633 = vmatpush.msra.mxu0 0.0
        %1634 = vmatpush.msra.mxu0 0.0
        %1635 = vmatpush.msra.mxu0 0.0
        %1636 = vmatpush.msra.mxu0 0.0
        %1637 = vmatpush.msra.mxu0 0.0
        %1638 = vmatpush.msra.mxu0 0.0
        %1639 = vmatpush.msra.mxu0 0.0
        %1640 = vmatpush.msra.mxu0 0.0
        %1641 = vmatpush.msra.mxu0 0.0
        %1642 = vmatpush.msra.mxu0 0.0
        %1643 = vmatpush.msra.mxu0 0.0
        %1644 = vmatpush.msra.mxu0 0.0
        %1645 = vmatpush.msra.mxu0 %v1178
        %1646 = vmatmul.f32.gmra.mxu0 %v1628
        %v1647 = vpop.f32.mrf.mxu0
        %v1648 = vadd.f32 0.0, %v1647
        %1649 = vdwg.mxu0
        %v1651 = vsel %vm1469, %v1554, 0
        %1653 = vmatpush.msra.mxu0 0.0
        %1654 = vmatpush.msra.mxu0 0.0
        %1655 = vmatpush.msra.mxu0 0.0
        %1656 = vmatpush.msra.mxu0 0.0
        %1657 = vmatpush.msra.mxu0 0.0
        %1658 = vmatpush.msra.mxu0 0.0
        %1659 = vmatpush.msra.mxu0 0.0
        %1660 = vmatpush.msra.mxu0 0.0
        %1661 = vmatpush.msra.mxu0 0.0
        %1662 = vmatpush.msra.mxu0 0.0
        %1663 = vmatpush.msra.mxu0 0.0
        %1664 = vmatpush.msra.mxu0 0.0
        %1665 = vmatpush.msra.mxu0 0.0
        %1666 = vmatpush.msra.mxu0 0.0
        %1667 = vmatpush.msra.mxu0 0.0
        %1668 = vmatpush.msra.mxu0 %v1198
        %1669 = vmatmul.f32.gmra.mxu0 %v1651
        %v1670 = vpop.f32.mrf.mxu0
        %v1671 = vadd.f32 0.0, %v1670
        %1672 = vdwg.mxu0
        %v1674 = vsel %vm1469, %v1555, 0
        %1676 = vmatpush.msra.mxu0 0.0
        %1677 = vmatpush.msra.mxu0 0.0
        %1678 = vmatpush.msra.mxu0 0.0
        %1679 = vmatpush.msra.mxu0 0.0
        %1680 = vmatpush.msra.mxu0 0.0
        %1681 = vmatpush.msra.mxu0 0.0
        %1682 = vmatpush.msra.mxu0 0.0
        %1683 = vmatpush.msra.mxu0 0.0
        %1684 = vmatpush.msra.mxu0 0.0
        %1685 = vmatpush.msra.mxu0 0.0
        %1686 = vmatpush.msra.mxu0 0.0
        %1687 = vmatpush.msra.mxu0 0.0
        %1688 = vmatpush.msra.mxu0 0.0
        %1689 = vmatpush.msra.mxu0 0.0
        %1690 = vmatpush.msra.mxu0 0.0
        %1691 = vmatpush.msra.mxu0 %v1218
        %1692 = vmatmul.f32.gmra.mxu0 %v1674
        %v1693 = vpop.f32.mrf.mxu0
        %v1694 = vadd.f32 0.0, %v1693
        %1695 = vdwg.mxu0
        %v1697 = vsel %vm1469, %v1556, 0
        %1699 = vmatpush.msra.mxu0 0.0
        %1700 = vmatpush.msra.mxu0 0.0
        %1701 = vmatpush.msra.mxu0 0.0
        %1702 = vmatpush.msra.mxu0 0.0
        %1703 = vmatpush.msra.mxu0 0.0
        %1704 = vmatpush.msra.mxu0 0.0
        %1705 = vmatpush.msra.mxu0 0.0
        %1706 = vmatpush.msra.mxu0 0.0
        %1707 = vmatpush.msra.mxu0 0.0
        %1708 = vmatpush.msra.mxu0 0.0
        %1709 = vmatpush.msra.mxu0 0.0
        %1710 = vmatpush.msra.mxu0 0.0
        %1711 = vmatpush.msra.mxu0 0.0
        %1712 = vmatpush.msra.mxu0 0.0
        %1713 = vmatpush.msra.mxu0 0.0
        %1714 = vmatpush.msra.mxu0 %v1238
        %1715 = vmatmul.f32.gmra.mxu0 %v1697
        %v1716 = vpop.f32.mrf.mxu0
        %v1717 = vadd.f32 0.0, %v1716
        %1718 = vdwg.mxu0
        %v1720 = vsel %vm1469, %v1557, 0
        %1722 = vmatpush.msra.mxu0 0.0
        %1723 = vmatpush.msra.mxu0 0.0
        %1724 = vmatpush.msra.mxu0 0.0
        %1725 = vmatpush.msra.mxu0 0.0
        %1726 = vmatpush.msra.mxu0 0.0
        %1727 = vmatpush.msra.mxu0 0.0
        %1728 = vmatpush.msra.mxu0 0.0
        %1729 = vmatpush.msra.mxu0 0.0
        %1730 = vmatpush.msra.mxu0 0.0
        %1731 = vmatpush.msra.mxu0 0.0
        %1732 = vmatpush.msra.mxu0 0.0
        %1733 = vmatpush.msra.mxu0 0.0
        %1734 = vmatpush.msra.mxu0 0.0
        %1735 = vmatpush.msra.mxu0 0.0
        %1736 = vmatpush.msra.mxu0 0.0
        %1737 = vmatpush.msra.mxu0 %v1258
        %1738 = vmatmul.f32.gmra.mxu0 %v1720
        %v1739 = vpop.f32.mrf.mxu0
        %v1740 = vadd.f32 0.0, %v1739
        %1741 = vdwg.mxu0
        %v1742 = vld [vmem:[%s9] sm:$0xf]
        %v1743 = vld [vmem:[%s9 + $0x4] sm:$0xf]
        %v1744 = vld [vmem:[%s9 + $0x8] sm:$0xf]
        %v1745 = vld [vmem:[%s9 + $0xc] sm:$0xf]
        %v1746 = vld [vmem:[%s9 + $0x10] sm:$0xf]
        %v1747 = vld [vmem:[%s9 + $0x14] sm:$0xf]
        %v1748 = vld [vmem:[%s9 + $0x18] sm:$0xf]
        %v1749 = vld [vmem:[%s9 + $0x1c] sm:$0xf]
        %v1751 = vsel %vm1260, %v1579, 0
        %vm1753 = vcmask 1043456
        %v1755 = vsel %vm1753, %v1742, 0
        %1757 = vmatpush.msra.mxu0 0.0
        %1758 = vmatpush.msra.mxu0 0.0
        %1759 = vmatpush.msra.mxu0 0.0
        %1760 = vmatpush.msra.mxu0 0.0
        %1761 = vmatpush.msra.mxu0 0.0
        %1762 = vmatpush.msra.mxu0 0.0
        %1763 = vmatpush.msra.mxu0 0.0
        %1764 = vmatpush.msra.mxu0 0.0
        %1765 = vmatpush.msra.mxu0 0.0
        %1766 = vmatpush.msra.mxu0 0.0
        %1767 = vmatpush.msra.mxu0 0.0
        %1768 = vmatpush.msra.mxu0 0.0
        %1769 = vmatpush.msra.mxu0 0.0
        %1770 = vmatpush.msra.mxu0 0.0
        %1771 = vmatpush.msra.mxu0 0.0
        %1772 = vmatpush.msra.mxu0 %v1755
        %1773 = vmatmul.f32.gmra.mxu0 %v1751
        %v1774 = vpop.f32.mrf.mxu0
        %v1775 = vadd.f32 0.0, %v1774
        %1776 = vdwg.mxu0
        %v1778 = vsel %vm1260, %v1602, 0
        %v1781 = vsel %vm1753, %v1743, 0
        %1783 = vmatpush.msra.mxu0 0.0
        %1784 = vmatpush.msra.mxu0 0.0
        %1785 = vmatpush.msra.mxu0 0.0
        %1786 = vmatpush.msra.mxu0 0.0
        %1787 = vmatpush.msra.mxu0 0.0
        %1788 = vmatpush.msra.mxu0 0.0
        %1789 = vmatpush.msra.mxu0 0.0
        %1790 = vmatpush.msra.mxu0 0.0
        %1791 = vmatpush.msra.mxu0 0.0
        %1792 = vmatpush.msra.mxu0 0.0
        %1793 = vmatpush.msra.mxu0 0.0
        %1794 = vmatpush.msra.mxu0 0.0
        %1795 = vmatpush.msra.mxu0 0.0
        %1796 = vmatpush.msra.mxu0 0.0
        %1797 = vmatpush.msra.mxu0 0.0
        %1798 = vmatpush.msra.mxu0 %v1781
        %1799 = vmatmul.f32.gmra.mxu0 %v1778
        %v1800 = vpop.f32.mrf.mxu0
        %v1801 = vadd.f32 0.0, %v1800
        %1802 = vdwg.mxu0
        %v1804 = vsel %vm1260, %v1625, 0
        %v1807 = vsel %vm1753, %v1744, 0
        %1809 = vmatpush.msra.mxu0 0.0
        %1810 = vmatpush.msra.mxu0 0.0
        %1811 = vmatpush.msra.mxu0 0.0
        %1812 = vmatpush.msra.mxu0 0.0
        %1813 = vmatpush.msra.mxu0 0.0
        %1814 = vmatpush.msra.mxu0 0.0
        %1815 = vmatpush.msra.mxu0 0.0
        %1816 = vmatpush.msra.mxu0 0.0
        %1817 = vmatpush.msra.mxu0 0.0
        %1818 = vmatpush.msra.mxu0 0.0
        %1819 = vmatpush.msra.mxu0 0.0
        %1820 = vmatpush.msra.mxu0 0.0
        %1821 = vmatpush.msra.mxu0 0.0
        %1822 = vmatpush.msra.mxu0 0.0
        %1823 = vmatpush.msra.mxu0 0.0
        %1824 = vmatpush.msra.mxu0 %v1807
        %1825 = vmatmul.f32.gmra.mxu0 %v1804
        %v1826 = vpop.f32.mrf.mxu0
        %v1827 = vadd.f32 0.0, %v1826
        %1828 = vdwg.mxu0
        %v1830 = vsel %vm1260, %v1648, 0
        %v1833 = vsel %vm1753, %v1745, 0
        %1835 = vmatpush.msra.mxu0 0.0
        %1836 = vmatpush.msra.mxu0 0.0
        %1837 = vmatpush.msra.mxu0 0.0
        %1838 = vmatpush.msra.mxu0 0.0
        %1839 = vmatpush.msra.mxu0 0.0
        %1840 = vmatpush.msra.mxu0 0.0
        %1841 = vmatpush.msra.mxu0 0.0
        %1842 = vmatpush.msra.mxu0 0.0
        %1843 = vmatpush.msra.mxu0 0.0
        %1844 = vmatpush.msra.mxu0 0.0
        %1845 = vmatpush.msra.mxu0 0.0
        %1846 = vmatpush.msra.mxu0 0.0
        %1847 = vmatpush.msra.mxu0 0.0
        %1848 = vmatpush.msra.mxu0 0.0
        %1849 = vmatpush.msra.mxu0 0.0
        %1850 = vmatpush.msra.mxu0 %v1833
        %1851 = vmatmul.f32.gmra.mxu0 %v1830
        %v1852 = vpop.f32.mrf.mxu0
        %v1853 = vadd.f32 0.0, %v1852
        %1854 = vdwg.mxu0
        %v1856 = vsel %vm1260, %v1671, 0
        %v1859 = vsel %vm1753, %v1746, 0
        %1861 = vmatpush.msra.mxu0 0.0
        %1862 = vmatpush.msra.mxu0 0.0
        %1863 = vmatpush.msra.mxu0 0.0
        %1864 = vmatpush.msra.mxu0 0.0
        %1865 = vmatpush.msra.mxu0 0.0
        %1866 = vmatpush.msra.mxu0 0.0
        %1867 = vmatpush.msra.mxu0 0.0
        %1868 = vmatpush.msra.mxu0 0.0
        %1869 = vmatpush.msra.mxu0 0.0
        %1870 = vmatpush.msra.mxu0 0.0
        %1871 = vmatpush.msra.mxu0 0.0
        %1872 = vmatpush.msra.mxu0 0.0
        %1873 = vmatpush.msra.mxu0 0.0
        %1874 = vmatpush.msra.mxu0 0.0
        %1875 = vmatpush.msra.mxu0 0.0
        %1876 = vmatpush.msra.mxu0 %v1859
        %1877 = vmatmul.f32.gmra.mxu0 %v1856
        %v1878 = vpop.f32.mrf.mxu0
        %v1879 = vadd.f32 0.0, %v1878
        %1880 = vdwg.mxu0
        %v1882 = vsel %vm1260, %v1694, 0
        %v1885 = vsel %vm1753, %v1747, 0
        %1887 = vmatpush.msra.mxu0 0.0
        %1888 = vmatpush.msra.mxu0 0.0
        %1889 = vmatpush.msra.mxu0 0.0
        %1890 = vmatpush.msra.mxu0 0.0
        %1891 = vmatpush.msra.mxu0 0.0
        %1892 = vmatpush.msra.mxu0 0.0
        %1893 = vmatpush.msra.mxu0 0.0
        %1894 = vmatpush.msra.mxu0 0.0
        %1895 = vmatpush.msra.mxu0 0.0
        %1896 = vmatpush.msra.mxu0 0.0
        %1897 = vmatpush.msra.mxu0 0.0
        %1898 = vmatpush.msra.mxu0 0.0
        %1899 = vmatpush.msra.mxu0 0.0
        %1900 = vmatpush.msra.mxu0 0.0
        %1901 = vmatpush.msra.mxu0 0.0
        %1902 = vmatpush.msra.mxu0 %v1885
        %1903 = vmatmul.f32.gmra.mxu0 %v1882
        %v1904 = vpop.f32.mrf.mxu0
        %v1905 = vadd.f32 0.0, %v1904
        %1906 = vdwg.mxu0
        %v1908 = vsel %vm1260, %v1717, 0
        %v1911 = vsel %vm1753, %v1748, 0
        %1913 = vmatpush.msra.mxu0 0.0
        %1914 = vmatpush.msra.mxu0 0.0
        %1915 = vmatpush.msra.mxu0 0.0
        %1916 = vmatpush.msra.mxu0 0.0
        %1917 = vmatpush.msra.mxu0 0.0
        %1918 = vmatpush.msra.mxu0 0.0
        %1919 = vmatpush.msra.mxu0 0.0
        %1920 = vmatpush.msra.mxu0 0.0
        %1921 = vmatpush.msra.mxu0 0.0
        %1922 = vmatpush.msra.mxu0 0.0
        %1923 = vmatpush.msra.mxu0 0.0
        %1924 = vmatpush.msra.mxu0 0.0
        %1925 = vmatpush.msra.mxu0 0.0
        %1926 = vmatpush.msra.mxu0 0.0
        %1927 = vmatpush.msra.mxu0 0.0
        %1928 = vmatpush.msra.mxu0 %v1911
        %1929 = vmatmul.f32.gmra.mxu0 %v1908
        %v1930 = vpop.f32.mrf.mxu0
        %v1931 = vadd.f32 0.0, %v1930
        %1932 = vdwg.mxu0
        %v1934 = vsel %vm1260, %v1740, 0
        %v1937 = vsel %vm1753, %v1749, 0
        %1939 = vmatpush.msra.mxu0 0.0
        %1940 = vmatpush.msra.mxu0 0.0
        %1941 = vmatpush.msra.mxu0 0.0
        %1942 = vmatpush.msra.mxu0 0.0
        %1943 = vmatpush.msra.mxu0 0.0
        %1944 = vmatpush.msra.mxu0 0.0
        %1945 = vmatpush.msra.mxu0 0.0
        %1946 = vmatpush.msra.mxu0 0.0
        %1947 = vmatpush.msra.mxu0 0.0
        %1948 = vmatpush.msra.mxu0 0.0
        %1949 = vmatpush.msra.mxu0 0.0
        %1950 = vmatpush.msra.mxu0 0.0
        %1951 = vmatpush.msra.mxu0 0.0
        %1952 = vmatpush.msra.mxu0 0.0
        %1953 = vmatpush.msra.mxu0 0.0
        %1954 = vmatpush.msra.mxu0 %v1937
        %1955 = vmatmul.f32.gmra.mxu0 %v1934
        %v1956 = vpop.f32.mrf.mxu0
        %v1957 = vadd.f32 0.0, %v1956
        %1958 = vdwg.mxu0
        %v1959 = vsel %vm547, %v1775, 0.0
        %v1960 = vsel %vm547, %v1801, 0.0
        %v1961 = vadd.f32 %v1959, %v1960
        %v1962 = vsel %vm547, %v1827, 0.0
        %v1963 = vadd.f32 %v1961, %v1962
        %v1964 = vsel %vm547, %v1853, 0.0
        %v1965 = vadd.f32 %v1963, %v1964
        %v1966 = vsel %vm547, %v1879, 0.0
        %v1967 = vadd.f32 %v1965, %v1966
        %v1968 = vsel %vm547, %v1905, 0.0
        %v1969 = vadd.f32 %v1967, %v1968
        %v1970 = vsel %vm547, %v1931, 0.0
        %v1971 = vadd.f32 %v1969, %v1970
        %v1972 = vsel %vm547, %v1957, 0.0
        %v1973 = vadd.f32 %v1971, %v1972
        %v1974 = vld [vmem:[%s10] sm:$0x1]
        %v1976 = vperm.slane %v1974, 0
        %v1978 = vadd.f32 %v1973, %v1976
        %v1979 = vadd.f32 %v544, %v1978
        %v1980 = vld [vmem:[%s11] sm:$0x1]
        %v1981 = vld [vmem:[%s12] sm:$0x1]
        %v1982 = vsel %vm547, %v1979, 0.0
        %1983 = vadd.xlane.f32.xlu0 %v1982
        %v1984 = vpop.xlane.xlu0 %1983
        %v1985 = vmul.f32 %v1984, %v557
        %v1986 = vsub.f32 %v1979, %v1985
        %v1987 = vmul.f32 %v1986, %v1986
        %v1988 = vsel %vm547, %v1987, 0.0
        %1989 = vadd.xlane.f32.xlu0 %v1988
        %v1990 = vpop.xlane.xlu0 %1989
        %v1991 = vmul.f32 %v1990, %v557
        %v1992 = vadd.f32 %v1991, 1e-05
        %v1993 = vrsqrt.pop %v1992
        %v1994 = vmul.f32 %v1993, %v1992
        %v1995 = vmul.f32 %v1994, %v1993
        %v1996 = vmul.f32 0.5, %v1995
        %v1997 = vsub.f32 1.5, %v1996
        %v1998 = vmul.f32 %v1993, %v1997
        %vm1999 = vweird.f32 %v1992
        %vm2000 = vweird.f32 %v1993
        %vm2001 = vmor %vm1999, %vm2000
        %v2002 = vsel %vm2001, %v1993, %v1998
        %v2003 = vmul.f32 %v1986, %v2002
        %v2005 = vperm.slane %v1980, 0
        %v2007 = vmul.f32 %v2003, %v2005
        %v2009 = vperm.slane %v1981, 0
        %v2011 = vadd.f32 %v2007, %v2009
        %v2012 = vld [vmem:[%s13] sm:$0xff]
        %v2013 = vld [vmem:[%s13 + $0x8] sm:$0xff]
        %v2014 = vld [vmem:[%s13 + $0x10] sm:$0xff]
        %v2015 = vld [vmem:[%s13 + $0x18] sm:$0xff]
        %v2016 = vld [vmem:[%s14] sm:$0x1]
        %v2018 = vperm.slane %v2016, 0
        %v2021 = vsel %vm547, %v2011, 0
        %2023 = vmatpush.msra.mxu0 0.0
        %2024 = vmatpush.msra.mxu0 0.0
        %2025 = vmatpush.msra.mxu0 0.0
        %2026 = vmatpush.msra.mxu0 0.0
        %2027 = vmatpush.msra.mxu0 0.0
        %2028 = vmatpush.msra.mxu0 0.0
        %2029 = vmatpush.msra.mxu0 0.0
        %2030 = vmatpush.msra.mxu0 0.0
        %2031 = vmatpush.msra.mxu0 0.0
        %2032 = vmatpush.msra.mxu0 0.0
        %2033 = vmatpush.msra.mxu0 0.0
        %2034 = vmatpush.msra.mxu0 0.0
        %2035 = vmatpush.msra.mxu0 %v2015
        %2036 = vmatpush.msra.mxu0 %v2014
        %2037 = vmatpush.msra.mxu0 %v2013
        %2038 = vmatpush.msra.mxu0 %v2012
        %2039 = vmatmul.f32.gmra.mxu0 %v2021
        %v2040 = vpop.f32.mrf.mxu0
        %v2041 = vadd.f32 %v2018, %v2040
        %2042 = vdwg.mxu0
        %v2043 = vmul.f32 %v2041, 0.5
        %v2044 = vmul.f32 %v2041, 0.70710677
        %v2045 = vmul.f32 %v2044, %v2044
        %v2046 = vmin.f32 16.0, %v2045
        %v2047 = vmul.f32 %v2046, 2.1237322e-06
        %v2048 = vadd.f32 %v2047, 0.00028619796
        %v2049 = vmul.f32 %v2046, %v2048
        %v2050 = vadd.f32 %v2049, 0.0036580483
        %v2051 = vmul.f32 %v2046, %v2050
        %v2052 = vadd.f32 %v2051, 0.05243302
        %v2053 = vmul.f32 %v2046, %v2052
        %v2054 = vadd.f32 %v2053, 0.18741608
        %v2055 = vmul.f32 %v2046, %v2054
        %v2056 = vadd.f32 %v2055, 1.1283791
        %v2057 = vmul.f32 %v2044, %v2056
        %v2058 = vmul.f32 %v2046, 3.8918573e-05
        %v2059 = vadd.f32 %v2058, 0.001143296
        %v2060 = vmul.f32 %v2046, %v2059
        %v2061 = vadd.f32 %v2060, 0.014752088
        %v2062 = vmul.f32 %v2046, %v2061
        %v2063 = vadd.f32 %v2062, 0.112945676
        %v2064 = vmul.f32 %v2046, %v2063
        %v2065 = vadd.f32 %v2064, 0.4994258
        %v2066 = vmul.f32 %v2046, %v2065
        %v2067 = vadd.f32 %v2066, 1.0
        %v2068 = vrcp.pop %v2067
        %v2069 = vmul.f32 %v2067, %v2068
        %v2070 = vsub.f32 1.0, %v2069
        %v2071 = vmul.f32 %v2068, %v2070
        %v2072 = vadd.f32 %v2068, %v2071
        %vm2073 = vweird.f32 %v2067
        %vm2074 = vweird.f32 %v2068
        %vm2075 = vmor %vm2073, %vm2074
        %v2076 = vsel %vm2075, %v2068, %v2072
        %v2077 = vand.u32 2147483647, %v2067
        %vm2078 = vcmp.eq.f32.partialorder %v2077, 8.507059e+37
        %v2079 = vand.u32 %v2067, 2147483648
        %v2080 = vor.u32 1.1754944e-38, %v2079
        %v2081 = vsel %vm2078, %v2080, %v2076
        %v2082 = vmul.f32 %v2057, %v2081
        %v2083 = vmin.f32 %v2082, 1.0
        %v2084 = vmax.f32 %v2083, -1.0
        %v2085 = vadd.f32 %v2084, 1.0
        %v2086 = vmul.f32 %v2043, %v2085
        %v2087 = vld [vmem:[%s15] sm:$0xff]
        %v2088 = vld [vmem:[%s15 + $0x8] sm:$0xff]
        %v2089 = vld [vmem:[%s15 + $0x10] sm:$0xff]
        %v2090 = vld [vmem:[%s15 + $0x18] sm:$0xff]
        %v2091 = vld [vmem:[%s15 + $0x20] sm:$0xff]
        %v2092 = vld [vmem:[%s15 + $0x28] sm:$0xff]
        %v2093 = vld [vmem:[%s15 + $0x30] sm:$0xff]
        %v2094 = vld [vmem:[%s15 + $0x38] sm:$0xff]
        %v2095 = vld [vmem:[%s15 + $0x40] sm:$0xff]
        %v2096 = vld [vmem:[%s15 + $0x48] sm:$0xff]
        %v2097 = vld [vmem:[%s15 + $0x50] sm:$0xff]
        %v2098 = vld [vmem:[%s15 + $0x58] sm:$0xff]
        %v2099 = vld [vmem:[%s15 + $0x60] sm:$0xff]
        %v2100 = vld [vmem:[%s15 + $0x68] sm:$0xff]
        %v2101 = vld [vmem:[%s15 + $0x70] sm:$0xff]
        %v2102 = vld [vmem:[%s15 + $0x78] sm:$0xff]
        %v2103 = vld [vmem:[%s16] sm:$0x1]
        %v2105 = vperm.slane %v2103, 0
        %2107 = vmatpush.msra.mxu0 %v2102
        %2108 = vmatpush.msra.mxu0 %v2101
        %2109 = vmatpush.msra.mxu0 %v2100
        %2110 = vmatpush.msra.mxu0 %v2099
        %2111 = vmatpush.msra.mxu0 %v2098
        %2112 = vmatpush.msra.mxu0 %v2097
        %2113 = vmatpush.msra.mxu0 %v2096
        %2114 = vmatpush.msra.mxu0 %v2095
        %2115 = vmatpush.msra.mxu0 %v2094
        %2116 = vmatpush.msra.mxu0 %v2093
        %2117 = vmatpush.msra.mxu0 %v2092
        %2118 = vmatpush.msra.mxu0 %v2091
        %2119 = vmatpush.msra.mxu0 %v2090
        %2120 = vmatpush.msra.mxu0 %v2089
        %2121 = vmatpush.msra.mxu0 %v2088
        %2122 = vmatpush.msra.mxu0 %v2087
        %2123 = vmatmul.f32.gmra.mxu0 %v2086
        %v2124 = vpop.f32.mrf.mxu0
        %v2125 = vadd.f32 %v2105, %v2124
        %2126 = vdwg.mxu0
        %v2127 = vadd.f32 %v1979, %v2125
        %2128 = vst.msk [vmem:[%s539] sm:$0xff] %vm547, %v2127
        %s2129 = sand.u32 %s401, 1
        %s2130 = scalar_lea.sflag [#allocation3], %s2129
        %s2131 = sand.u32 %s401, 1
        %s2132 = smul.addr %s2131, 8
        %s2133 = scalar_lea.vmem [#allocation2], %s2132
        // Predicated region
        $region89: #{tpu_custom_call.1} parent=87 // pred_check
          %p2134 = pneg %p411
        $region90: #{tpu_custom_call.1} parent=87 // pred_check_branch
          %2136 = sbr.rel (%p2134) target = $region92
        $region91: #{tpu_custom_call.1} parent=87 // pred_region
          %2138 = vsyncadd %s2130, 0
          %s2139 = smul.addr %s31, 8
          %s2140 = scalar_lea.hbm %s17, %s2139
          %s2142 = sshll.u32 %s2133, 4
          %s2143 = int_to_ptr.vmem [resolvable:$true] %s2142
          %s2144 = sshll.u32 %s2140, 4
          %s2145 = int_to_ptr.hbm [resolvable:$true] %s2144
          %2147 = dma.vmem_to_hbm [thread:$0]  %s2143, 128, %s2145, %s2130
        $region92: #{tpu_custom_call.1} parent=87 // pred_fallthru
          _
      $region88: #{tpu_custom_call.1} parent=5 // pred_fallthru
        _
      %p2148 = scmp.le.s32.totalorder 2, %s26
      // Predicated region
      $region93: #{tpu_custom_call.1} parent=5 // pred_check
        %p2149 = pneg %p2148
      $region94: #{tpu_custom_call.1} parent=5 // pred_check_branch
        %2151 = sbr.rel (%p2149) target = $region96
      $region95: #{tpu_custom_call.1} parent=5 // pred_region
        %s2152 = ssub.s32 %s26, 2
        // Predicated region
        $region97: #{tpu_custom_call.1} parent=95 // pred_check
          %p2153 = pneg %p417
        $region98: #{tpu_custom_call.1} parent=95 // pred_check_branch
          %2155 = sbr.rel (%p2153) target = $region100
        $region99: #{tpu_custom_call.1} parent=95 // pred_region
          %s2156 = sand.u32 %s402, 1
          %s2157 = scalar_lea.sflag [#allocation3], %s2156
          %s2158 = sand.u32 %s402, 1
          %s2159 = smul.addr %s2158, 8
          %s2160 = scalar_lea.vmem [#allocation2], %s2159
          %2162 = dma.done %s2157, 128
        $region100: #{tpu_custom_call.1} parent=95 // pred_fallthru
          _
      $region96: #{tpu_custom_call.1} parent=5 // pred_fallthru
        _
    $region6: #{tpu_custom_call.1} parent=1 // loop_footer
      %s30 = sadd.s32 1, %s26
    $region7: #{tpu_custom_call.1} parent=1 // loop_footer_branch
      %25 = sbr.rel target = $region3
    $region8: #{tpu_custom_call.1} parent=1 // loop_exit
      _
    %2163 = vsyncpa [#allocation3], 1
    %s2164 = scalar_lea.sflag [#allocation3], 1
    %2165 = vsyncpa %s2164, 1

</llo_original>
